<compile_context>
chip_gen: v7x
topology: tpu7x:2x2x1
jax: 0.10.0
libtpu: 0.0.40
codegen_flags: <defaults>
</compile_context>

<pallas_src>
import jax
import jax.numpy as jnp
from jax.experimental import pallas as pl
from jax.experimental.pallas import tpu as pltpu

COMPUTE_DTYPE = jnp.bfloat16  # MXU input dtype; accumulation is always f32


def resnet_kernel(x_ref, bw_ref, bb_ref,
                  mw1_ref, mb1_ref, sw1_ref, sb1_ref,
                  w2_ref, b2_ref, ow_ref, ob_ref,
                  out_ref, sum_sc, side_sc):
    l = pl.program_id(1)
    L = pl.num_programs(1)
    relu = lambda v: jnp.maximum(v, 0.0)

    def mm(a, w_bf16):
        # Cast activations to bf16 at the MXU input, accumulate in f32.
        return jnp.dot(a.astype(COMPUTE_DTYPE), w_bf16,
                       preferred_element_type=jnp.float32)

    # ---- layer 0: base Linear + ReLU, initialize the recurrence state ----
    @pl.when(l == 0)
    def _():
        h = relu(mm(x_ref[...], bw_ref[...]) + bb_ref[...])  # (TB, W) f32
        sum_sc[...] = h        # running sum(output_list)
        side_sc[...] = h       # input_side (frozen after layer 0)

    count = (l + 1).astype(jnp.float32)              # len(output_list) so far
    input_main = sum_sc[...] * (1.0 / count)         # sum(output_list)/len(...)
    input_side = side_sc[...]

    # main / side first Linear + ReLU (Dropout is identity in eval mode).
    # Cast to bf16 right after ReLU so the concat copy is half-width.
    t_main = relu(mm(input_main, mw1_ref[...]) + mb1_ref[...]).astype(COMPUTE_DTYPE)
    t_side = relu(mm(input_side, sw1_ref[...]) + sb1_ref[...]).astype(COMPUTE_DTYPE)

    # Fused second Linear of both branches:
    #   om + os = [t_main | t_side] @ [[main_w2], [side_w2]] + (main_b2+side_b2)
    t_cat = jnp.concatenate([t_main, t_side], axis=-1)           # (TB, 2W) bf16
    mid = 0.5 * (jnp.dot(t_cat, w2_ref[...],
                         preferred_element_type=jnp.float32) + b2_ref[...])

    new_sum = sum_sc[...] + mid
    sum_sc[...] = new_sum

    @pl.when(l == 0)
    def _():
        # input_side is frozen to input_main computed after layer 0.
        side_sc[...] = new_sum * 0.5

    # ---- last layer: output Linear(width, 1), stored lane-dense as (1, TB) --
    @pl.when(l == L - 1)
    def _():
        final_main = (new_sum * (1.0 / (count + 1.0))).astype(COMPUTE_DTYPE)
        # (1, W) x (TB, W)^T -> (1, TB): y[0, b] = sum_w ow[0, w] * x[b, w]
        proj = jax.lax.dot_general(
            ow_ref[...], final_main,
            dimension_numbers=(((1,), (1,)), ((), ())),
            preferred_element_type=jnp.float32)
        out_ref[...] = proj + ob_ref[...]


def resnet_forward(x, params, *, tb=128):
    """x: (B, H, W_in) or (B, input_size); returns (B,) like torch.flatten."""
    base_w = params["base_w"]
    input_size, width = base_w.shape
    L = params["main_w1"].shape[0]
    W = width

    x2 = x.reshape((-1, input_size)).astype(COMPUTE_DTYPE)
    B = x2.shape[0]
    n_tiles = pl.cdiv(B, tb)
    Bp = n_tiles * tb
    if Bp != B:
        x2 = jnp.pad(x2, ((0, Bp - B), (0, 0)))

    # --- pack / cast weights (bf16 for MXU, f32 biases) -----------------
    bw = base_w.astype(COMPUTE_DTYPE)
    bb = params["base_b"].astype(jnp.float32)
    mw1 = params["main_w1"].astype(COMPUTE_DTYPE)
    mb1 = params["main_b1"].astype(jnp.float32)
    sw1 = params["side_w1"].astype(COMPUTE_DTYPE)
    sb1 = params["side_b1"].astype(jnp.float32)
    # Fuse the two second linears: (L, 2W, W) weight, summed biases.
    w2cat = jnp.concatenate(
        [params["main_w2"], params["side_w2"]], axis=1).astype(COMPUTE_DTYPE)
    b2sum = (params["main_b2"] + params["side_b2"]).astype(jnp.float32)
    ow_row = params["out_w"].reshape(1, W).astype(COMPUTE_DTYPE)   # (1, W)
    ob = params["out_b"].reshape(1, 1).astype(jnp.float32)

    out = pl.pallas_call(
        resnet_kernel,
        out_shape=jax.ShapeDtypeStruct((1, Bp), jnp.float32),
        grid_spec=pltpu.PrefetchScalarGridSpec(
            num_scalar_prefetch=0,
            grid=(n_tiles, L),
            in_specs=[
                pl.BlockSpec((tb, input_size), lambda b, l: (b, 0)),   # x tile
                pl.BlockSpec((input_size, W), lambda b, l: (0, 0)),    # base_w
                pl.BlockSpec((1, W), lambda b, l: (0, 0)),             # base_b
                pl.BlockSpec((None, W, W), lambda b, l: (l, 0, 0)),    # main w1
                pl.BlockSpec((None, 1, W), lambda b, l: (l, 0, 0)),    # main b1
                pl.BlockSpec((None, W, W), lambda b, l: (l, 0, 0)),    # side w1
                pl.BlockSpec((None, 1, W), lambda b, l: (l, 0, 0)),    # side b1
                pl.BlockSpec((None, 2 * W, W), lambda b, l: (l, 0, 0)),# fused w2
                pl.BlockSpec((None, 1, W), lambda b, l: (l, 0, 0)),    # fused b2
                pl.BlockSpec((1, W), lambda b, l: (0, 0)),             # out_w row
                pl.BlockSpec((1, 1), lambda b, l: (0, 0)),             # out_b
            ],
            out_specs=pl.BlockSpec((1, tb), lambda b, l: (0, b)),      # lane-dense
            scratch_shapes=[pltpu.VMEM((tb, W), jnp.float32),   # sum(output_list)
                            pltpu.VMEM((tb, W), jnp.float32)],  # input_side
        ),
        compiler_params=pltpu.CompilerParams(
            dimension_semantics=("parallel", "arbitrary"),
            vmem_limit_bytes=32 * 1024 * 1024),
    )(x2, bw, bb, mw1, mb1, sw1, sb1, w2cat, b2sum, ow_row, ob)

    return out.reshape(-1)[:B]


def init_params(key, input_size, width, layer_number):
    """Deterministic init mimicking PyTorch Linear default (uniform +/- 1/sqrt(fan_in)).
    Weights are stored transposed as (in_features, out_features)."""
    ks = jax.random.split(key, 6 + 8 * layer_number)
    ki = iter(ks)

    def lin(kw, kb, fan_in, fan_out):
        bound = 1.0 / jnp.sqrt(fan_in)
        w = jax.random.uniform(kw, (fan_in, fan_out), jnp.float32, -bound, bound)
        b = jax.random.uniform(kb, (1, fan_out), jnp.float32, -bound, bound)
        return w, b

    base_w, base_b = lin(next(ki), next(ki), input_size, width)
    out_w, out_b = lin(next(ki), next(ki), width, 1)

    def stack_blocks():
        w1s, b1s, w2s, b2s = [], [], [], []
        for _ in range(layer_number):
            w1, b1 = lin(next(ki), next(ki), width, width)
            w2, b2 = lin(next(ki), next(ki), width, width)
            w1s.append(w1); b1s.append(b1); w2s.append(w2); b2s.append(b2)
        return (jnp.stack(w1s), jnp.stack(b1s), jnp.stack(w2s), jnp.stack(b2s))

    main_w1, main_b1, main_w2, main_b2 = stack_blocks()
    side_w1, side_b1, side_w2, side_b2 = stack_blocks()

    return dict(base_w=base_w, base_b=base_b,
                main_w1=main_w1, main_b1=main_b1,
                main_w2=main_w2, main_b2=main_b2,
                side_w1=side_w1, side_b1=side_b1,
                side_w2=side_w2, side_b2=side_b2,
                out_w=out_w, out_b=out_b)


def reference_forward(x, params):
    """Pure-JAX reference reproducing the PyTorch forward (eval mode), with the
    same bf16-at-MXU-input / f32-accumulate numerics as the kernel."""
    def mm(a, w):
        return jnp.dot(a.astype(COMPUTE_DTYPE), w.astype(COMPUTE_DTYPE),
                       preferred_element_type=jnp.float32)
    act = lambda v: jnp.maximum(v, 0.0)

    input_size = params["base_w"].shape[0]
    x = x.reshape((-1, input_size)).astype(jnp.float32)
    h = act(mm(x, params["base_w"]) + params["base_b"])
    output_list = [h]
    input_main = h
    input_side = h
    L = params["main_w1"].shape[0]
    for i in range(L):
        om = mm(act(mm(input_main, params["main_w1"][i]) + params["main_b1"][i]),
                params["main_w2"][i]) + params["main_b2"][i]
        os = mm(act(mm(input_side, params["side_w1"][i]) + params["side_b1"][i]),
                params["side_w2"][i]) + params["side_b2"][i]
        mid = (om + os) / 2.0
        output_list.append(mid)
        input_main = sum(output_list) / len(output_list)
        if i == 0:
            input_side = input_main
    y = mm(input_main, params["out_w"]) + params["out_b"]
    return y.reshape((-1,))


if __name__ == "__main__":
    # MXU / (8,128)-aligned but small: input 16x16 -> input_size=256,
    # width=128, 4 residual layers, batch 256 (2 batch tiles of 128).
    input_shape = (16, 16)
    layer_number = 4
    width = 128
    batch = 256
    input_size = input_shape[0] * input_shape[1]

    key = jax.random.PRNGKey(0)
    kx, kp = jax.random.split(key)
    x = jax.random.normal(kx, (batch, input_shape[0], input_shape[1]), jnp.float32)
    params = init_params(kp, input_size, width, layer_number)

    fwd = jax.jit(resnet_forward)
    out = jax.block_until_ready(fwd(x, params))
    ref = reference_forward(x, params)

    assert out.shape == (batch,), out.shape
    assert jnp.allclose(out, ref, atol=2e-2, rtol=2e-2), \
        float(jnp.max(jnp.abs(out - ref)))
    print("KERNEL_OK")
</pallas_src>

<mosaic_0001>
module attributes {stable_mosaic.version = 11 : i64} {
  func.func @resnet_kernel(%arg0: i32, %arg1: i32, %arg2: memref<128x256xbf16, #tpu.memory_space<vmem>>, %arg3: memref<256x128xbf16, #tpu.memory_space<vmem>>, %arg4: memref<1x128xf32, #tpu.memory_space<vmem>>, %arg5: memref<1x128x128xbf16, #tpu.memory_space<vmem>>, %arg6: memref<1x1x128xf32, #tpu.memory_space<vmem>>, %arg7: memref<1x128x128xbf16, #tpu.memory_space<vmem>>, %arg8: memref<1x1x128xf32, #tpu.memory_space<vmem>>, %arg9: memref<1x256x128xbf16, #tpu.memory_space<vmem>>, %arg10: memref<1x1x128xf32, #tpu.memory_space<vmem>>, %arg11: memref<1x128xbf16, #tpu.memory_space<vmem>>, %arg12: memref<1x1xf32, #tpu.memory_space<vmem>>, %arg13: memref<1x128xf32, #tpu.memory_space<vmem>>, %arg14: memref<128x128xf32, #tpu.memory_space<vmem>>, %arg15: memref<128x128xf32, #tpu.memory_space<vmem>>) attributes {dimension_semantics = [#tpu.dimension_semantics<parallel>, #tpu.dimension_semantics<arbitrary>], iteration_bounds = array<i64: 2, 4>, scalar_prefetch = 0 : i64, scratch_operands = 2 : i64, tpu.core_type = #tpu.core_type<tc>, window_params = [{transform_indices = @transform_0, window_bounds = array<i64: 128, 256>}, {pipeline_mode = #tpu.pipeline_mode<synchronous>, transform_indices = @transform_1, window_bounds = array<i64: 256, 128>}, {pipeline_mode = #tpu.pipeline_mode<synchronous>, transform_indices = @transform_2, window_bounds = array<i64: 1, 128>}, {transform_indices = @transform_3, window_bounds = array<i64: 1, 128, 128>}, {transform_indices = @transform_4, window_bounds = array<i64: 1, 1, 128>}, {transform_indices = @transform_5, window_bounds = array<i64: 1, 128, 128>}, {transform_indices = @transform_6, window_bounds = array<i64: 1, 1, 128>}, {transform_indices = @transform_7, window_bounds = array<i64: 1, 256, 128>}, {transform_indices = @transform_8, window_bounds = array<i64: 1, 1, 128>}, {pipeline_mode = #tpu.pipeline_mode<synchronous>, transform_indices = @transform_9, window_bounds = array<i64: 1, 128>}, {pipeline_mode = #tpu.pipeline_mode<synchronous>, transform_indices = @transform_10, window_bounds = array<i64: 1, 1>}, {transform_indices = @transform_11, window_bounds = array<i64: 1, 128>}]} {
    %c0_i32 = arith.constant 0 : i32
    %0 = arith.cmpi eq, %arg1, %c0_i32 : i32
    %1 = arith.extui %0 : i1 to i32
    %c0_i32_0 = arith.constant 0 : i32
    %2 = arith.cmpi ne, %1, %c0_i32_0 : i32
    scf.if %2 {
      %c0_35 = arith.constant 0 : index
      %c0_36 = arith.constant 0 : index
      %51 = vector.load %arg2[%c0_35, %c0_36] : memref<128x256xbf16, #tpu.memory_space<vmem>>, vector<128x256xbf16>
      %c0_37 = arith.constant 0 : index
      %c0_38 = arith.constant 0 : index
      %52 = vector.load %arg3[%c0_37, %c0_38] : memref<256x128xbf16, #tpu.memory_space<vmem>>, vector<256x128xbf16>
      %cst_39 = arith.constant dense<0.000000e+00> : vector<128x128xf32>
      %53 = tpu.matmul %51, %52, %cst_39 {dimension_numbers = #tpu.dot_dimension_numbers<[1], [0], [0], [1], [0, 0, 1, 1], [], []>} : vector<128x256xbf16>, vector<256x128xbf16>, vector<128x128xf32> -> vector<128x128xf32>
      %c0_40 = arith.constant 0 : index
      %c0_41 = arith.constant 0 : index
      %54 = vector.load %arg4[%c0_40, %c0_41] : memref<1x128xf32, #tpu.memory_space<vmem>>, vector<1x128xf32>
      %55 = vector.broadcast %54 : vector<1x128xf32> to vector<128x128xf32>
      %56 = arith.addf %53, %55 : vector<128x128xf32>
      %cst_42 = arith.constant 0.000000e+00 : f32
      %57 = vector.broadcast %cst_42 : f32 to vector<128x128xf32>
      %58 = arith.maximumf %56, %57 : vector<128x128xf32>
      %c0_43 = arith.constant 0 : index
      %c0_44 = arith.constant 0 : index
      %59 = vector.load %arg14[%c0_43, %c0_44] : memref<128x128xf32, #tpu.memory_space<vmem>>, vector<128x128xf32>
      tpu.vector_store %arg14[%c0_43, %c0_44], %58 {strides = array<i32>} : memref<128x128xf32, #tpu.memory_space<vmem>>, vector<128x128xf32>,
      %c0_45 = arith.constant 0 : index
      %c0_46 = arith.constant 0 : index
      %60 = vector.load %arg15[%c0_45, %c0_46] : memref<128x128xf32, #tpu.memory_space<vmem>>, vector<128x128xf32>
      tpu.vector_store %arg15[%c0_45, %c0_46], %58 {strides = array<i32>} : memref<128x128xf32, #tpu.memory_space<vmem>>, vector<128x128xf32>,
    } else {
    }
    %c1_i32 = arith.constant 1 : i32
    %3 = arith.addi %arg1, %c1_i32 : i32
    %4 = arith.sitofp %3 : i32 to f32
    %c0 = arith.constant 0 : index
    %c0_1 = arith.constant 0 : index
    %5 = vector.load %arg14[%c0, %c0_1] : memref<128x128xf32, #tpu.memory_space<vmem>>, vector<128x128xf32>
    %cst = arith.constant 1.000000e+00 : f32
    %6 = arith.divf %cst, %4 : f32
    %7 = vector.broadcast %6 : f32 to vector<128x128xf32>
    %8 = arith.mulf %5, %7 : vector<128x128xf32>
    %c0_2 = arith.constant 0 : index
    %c0_3 = arith.constant 0 : index
    %9 = vector.load %arg15[%c0_2, %c0_3] : memref<128x128xf32, #tpu.memory_space<vmem>>, vector<128x128xf32>
    %c0_4 = arith.constant 0 : index
    %c0_5 = arith.constant 0 : index
    %c0_6 = arith.constant 0 : index
    %10 = vector.load %arg5[%c0_4, %c0_5, %c0_6] : memref<1x128x128xbf16, #tpu.memory_space<vmem>>, vector<1x128x128xbf16>
    %11 = vector.shape_cast %10 : vector<1x128x128xbf16> to vector<128x128xbf16>
    %12 = arith.truncf %8 : vector<128x128xf32> to vector<128x128xbf16>
    %cst_7 = arith.constant dense<0.000000e+00> : vector<128x128xf32>
    %13 = tpu.matmul %12, %11, %cst_7 {dimension_numbers = #tpu.dot_dimension_numbers<[1], [0], [0], [1], [0, 0, 1, 1], [], []>} : vector<128x128xbf16>, vector<128x128xbf16>, vector<128x128xf32> -> vector<128x128xf32>
    %c0_8 = arith.constant 0 : index
    %c0_9 = arith.constant 0 : index
    %c0_10 = arith.constant 0 : index
    %14 = vector.load %arg6[%c0_8, %c0_9, %c0_10] : memref<1x1x128xf32, #tpu.memory_space<vmem>>, vector<1x1x128xf32>
    %15 = vector.shape_cast %14 : vector<1x1x128xf32> to vector<1x128xf32>
    %16 = vector.broadcast %15 : vector<1x128xf32> to vector<128x128xf32>
    %17 = arith.addf %13, %16 : vector<128x128xf32>
    %cst_11 = arith.constant 0.000000e+00 : f32
    %18 = vector.broadcast %cst_11 : f32 to vector<128x128xf32>
    %19 = arith.maximumf %17, %18 : vector<128x128xf32>
    %20 = arith.truncf %19 : vector<128x128xf32> to vector<128x128xbf16>
    %c0_12 = arith.constant 0 : index
    %c0_13 = arith.constant 0 : index
    %c0_14 = arith.constant 0 : index
    %21 = vector.load %arg7[%c0_12, %c0_13, %c0_14] : memref<1x128x128xbf16, #tpu.memory_space<vmem>>, vector<1x128x128xbf16>
    %22 = vector.shape_cast %21 : vector<1x128x128xbf16> to vector<128x128xbf16>
    %23 = arith.truncf %9 : vector<128x128xf32> to vector<128x128xbf16>
    %cst_15 = arith.constant dense<0.000000e+00> : vector<128x128xf32>
    %24 = tpu.matmul %23, %22, %cst_15 {dimension_numbers = #tpu.dot_dimension_numbers<[1], [0], [0], [1], [0, 0, 1, 1], [], []>} : vector<128x128xbf16>, vector<128x128xbf16>, vector<128x128xf32> -> vector<128x128xf32>
    %c0_16 = arith.constant 0 : index
    %c0_17 = arith.constant 0 : index
    %c0_18 = arith.constant 0 : index
    %25 = vector.load %arg8[%c0_16, %c0_17, %c0_18] : memref<1x1x128xf32, #tpu.memory_space<vmem>>, vector<1x1x128xf32>
    %26 = vector.shape_cast %25 : vector<1x1x128xf32> to vector<1x128xf32>
    %27 = vector.broadcast %26 : vector<1x128xf32> to vector<128x128xf32>
    %28 = arith.addf %24, %27 : vector<128x128xf32>
    %cst_19 = arith.constant 0.000000e+00 : f32
    %29 = vector.broadcast %cst_19 : f32 to vector<128x128xf32>
    %30 = arith.maximumf %28, %29 : vector<128x128xf32>
    %31 = arith.truncf %30 : vector<128x128xf32> to vector<128x128xbf16>
    %32 = tpu.concatenate %20, %31 in 1 : vector<128x128xbf16>, vector<128x128xbf16> -> vector<128x256xbf16>
    %c0_20 = arith.constant 0 : index
    %c0_21 = arith.constant 0 : index
    %c0_22 = arith.constant 0 : index
    %33 = vector.load %arg9[%c0_20, %c0_21, %c0_22] : memref<1x256x128xbf16, #tpu.memory_space<vmem>>, vector<1x256x128xbf16>
    %34 = vector.shape_cast %33 : vector<1x256x128xbf16> to vector<256x128xbf16>
    %cst_23 = arith.constant dense<0.000000e+00> : vector<128x128xf32>
    %35 = tpu.matmul %32, %34, %cst_23 {dimension_numbers = #tpu.dot_dimension_numbers<[1], [0], [0], [1], [0, 0, 1, 1], [], []>} : vector<128x256xbf16>, vector<256x128xbf16>, vector<128x128xf32> -> vector<128x128xf32>
    %c0_24 = arith.constant 0 : index
    %c0_25 = arith.constant 0 : index
    %c0_26 = arith.constant 0 : index
    %36 = vector.load %arg10[%c0_24, %c0_25, %c0_26] : memref<1x1x128xf32, #tpu.memory_space<vmem>>, vector<1x1x128xf32>
    %37 = vector.shape_cast %36 : vector<1x1x128xf32> to vector<1x128xf32>
    %38 = vector.broadcast %37 : vector<1x128xf32> to vector<128x128xf32>
    %39 = arith.addf %35, %38 : vector<128x128xf32>
    %cst_27 = arith.constant 5.000000e-01 : f32
    %40 = vector.broadcast %cst_27 : f32 to vector<128x128xf32>
    %41 = arith.mulf %40, %39 : vector<128x128xf32>
    %c0_28 = arith.constant 0 : index
    %c0_29 = arith.constant 0 : index
    %42 = vector.load %arg14[%c0_28, %c0_29] : memref<128x128xf32, #tpu.memory_space<vmem>>, vector<128x128xf32>
    %43 = arith.addf %42, %41 : vector<128x128xf32>
    %c0_30 = arith.constant 0 : index
    %c0_31 = arith.constant 0 : index
    %44 = vector.load %arg14[%c0_30, %c0_31] : memref<128x128xf32, #tpu.memory_space<vmem>>, vector<128x128xf32>
    tpu.vector_store %arg14[%c0_30, %c0_31], %43 {strides = array<i32>} : memref<128x128xf32, #tpu.memory_space<vmem>>, vector<128x128xf32>,
    %c0_i32_32 = arith.constant 0 : i32
    %45 = arith.cmpi eq, %arg1, %c0_i32_32 : i32
    %46 = arith.extui %45 : i1 to i32
    %c0_i32_33 = arith.constant 0 : i32
    %47 = arith.cmpi ne, %46, %c0_i32_33 : i32
    scf.if %47 {
      %cst_35 = arith.constant 5.000000e-01 : f32
      %51 = vector.broadcast %cst_35 : f32 to vector<128x128xf32>
      %52 = arith.mulf %43, %51 : vector<128x128xf32>
      %c0_36 = arith.constant 0 : index
      %c0_37 = arith.constant 0 : index
      %53 = vector.load %arg15[%c0_36, %c0_37] : memref<128x128xf32, #tpu.memory_space<vmem>>, vector<128x128xf32>
      tpu.vector_store %arg15[%c0_36, %c0_37], %52 {strides = array<i32>} : memref<128x128xf32, #tpu.memory_space<vmem>>, vector<128x128xf32>,
    } else {
    }
    %c3_i32 = arith.constant 3 : i32
    %48 = arith.cmpi eq, %arg1, %c3_i32 : i32
    %49 = arith.extui %48 : i1 to i32
    %c0_i32_34 = arith.constant 0 : i32
    %50 = arith.cmpi ne, %49, %c0_i32_34 : i32
    scf.if %50 {
      %cst_35 = arith.constant 1.000000e+00 : f32
      %51 = arith.addf %4, %cst_35 : f32
      %cst_36 = arith.constant 1.000000e+00 : f32
      %52 = arith.divf %cst_36, %51 : f32
      %53 = vector.broadcast %52 : f32 to vector<128x128xf32>
      %54 = arith.mulf %43, %53 : vector<128x128xf32>
      %55 = arith.truncf %54 : vector<128x128xf32> to vector<128x128xbf16>
      %c0_37 = arith.constant 0 : index
      %c0_38 = arith.constant 0 : index
      %56 = vector.load %arg11[%c0_37, %c0_38] : memref<1x128xbf16, #tpu.memory_space<vmem>>, vector<1x128xbf16>
      %cst_39 = arith.constant dense<0.000000e+00> : vector<1x128xf32>
      %57 = tpu.matmul %56, %55, %cst_39 {dimension_numbers = #tpu.dot_dimension_numbers<[1], [1], [0], [0], [0, 0, 1, 0], [], []>} : vector<1x128xbf16>, vector<128x128xbf16>, vector<1x128xf32> -> vector<1x128xf32>
      %c0_40 = arith.constant 0 : index
      %c0_41 = arith.constant 0 : index
      %58 = vector.load %arg12[%c0_40, %c0_41] : memref<1x1xf32, #tpu.memory_space<vmem>>, vector<1x1xf32>
      %59 = vector.broadcast %58 : vector<1x1xf32> to vector<1x128xf32>
      %60 = arith.addf %57, %59 : vector<1x128xf32>
      %c0_42 = arith.constant 0 : index
      %c0_43 = arith.constant 0 : index
      %61 = vector.load %arg13[%c0_42, %c0_43] : memref<1x128xf32, #tpu.memory_space<vmem>>, vector<1x128xf32>
      tpu.vector_store %arg13[%c0_42, %c0_43], %60 {strides = array<i32>} : memref<1x128xf32, #tpu.memory_space<vmem>>, vector<1x128xf32>,
    } else {
    }
    return
  }
  func.func @transform_0(%arg0: i32, %arg1: i32) -> (i32, i32) {
    %c0_i32 = arith.constant 0 : i32
    %c0_i32_0 = arith.constant 0 : i32
    return %arg0, %c0_i32 : i32, i32
  }
  func.func @transform_1(%arg0: i32, %arg1: i32) -> (i32, i32) {
    %c0_i32 = arith.constant 0 : i32
    %c0_i32_0 = arith.constant 0 : i32
    %c0_i32_1 = arith.constant 0 : i32
    return %c0_i32, %c0_i32_0 : i32, i32
  }
  func.func @transform_2(%arg0: i32, %arg1: i32) -> (i32, i32) {
    %c0_i32 = arith.constant 0 : i32
    %c0_i32_0 = arith.constant 0 : i32
    %c0_i32_1 = arith.constant 0 : i32
    return %c0_i32, %c0_i32_0 : i32, i32
  }
  func.func @transform_3(%arg0: i32, %arg1: i32) -> (i32, i32, i32) {
    %c0_i32 = arith.constant 0 : i32
    %c0_i32_0 = arith.constant 0 : i32
    %c0_i32_1 = arith.constant 0 : i32
    return %arg1, %c0_i32, %c0_i32_0 : i32, i32, i32
  }
  func.func @transform_4(%arg0: i32, %arg1: i32) -> (i32, i32, i32) {
    %c0_i32 = arith.constant 0 : i32
    %c0_i32_0 = arith.constant 0 : i32
    %c0_i32_1 = arith.constant 0 : i32
    return %arg1, %c0_i32, %c0_i32_0 : i32, i32, i32
  }
  func.func @transform_5(%arg0: i32, %arg1: i32) -> (i32, i32, i32) {
    %c0_i32 = arith.constant 0 : i32
    %c0_i32_0 = arith.constant 0 : i32
    %c0_i32_1 = arith.constant 0 : i32
    return %arg1, %c0_i32, %c0_i32_0 : i32, i32, i32
  }
  func.func @transform_6(%arg0: i32, %arg1: i32) -> (i32, i32, i32) {
    %c0_i32 = arith.constant 0 : i32
    %c0_i32_0 = arith.constant 0 : i32
    %c0_i32_1 = arith.constant 0 : i32
    return %arg1, %c0_i32, %c0_i32_0 : i32, i32, i32
  }
  func.func @transform_7(%arg0: i32, %arg1: i32) -> (i32, i32, i32) {
    %c0_i32 = arith.constant 0 : i32
    %c0_i32_0 = arith.constant 0 : i32
    %c0_i32_1 = arith.constant 0 : i32
    return %arg1, %c0_i32, %c0_i32_0 : i32, i32, i32
  }
  func.func @transform_8(%arg0: i32, %arg1: i32) -> (i32, i32, i32) {
    %c0_i32 = arith.constant 0 : i32
    %c0_i32_0 = arith.constant 0 : i32
    %c0_i32_1 = arith.constant 0 : i32
    return %arg1, %c0_i32, %c0_i32_0 : i32, i32, i32
  }
  func.func @transform_9(%arg0: i32, %arg1: i32) -> (i32, i32) {
    %c0_i32 = arith.constant 0 : i32
    %c0_i32_0 = arith.constant 0 : i32
    %c0_i32_1 = arith.constant 0 : i32
    return %c0_i32, %c0_i32_0 : i32, i32
  }
  func.func @transform_10(%arg0: i32, %arg1: i32) -> (i32, i32) {
    %c0_i32 = arith.constant 0 : i32
    %c0_i32_0 = arith.constant 0 : i32
    %c0_i32_1 = arith.constant 0 : i32
    return %c0_i32, %c0_i32_0 : i32, i32
  }
  func.func @transform_11(%arg0: i32, %arg1: i32) -> (i32, i32) {
    %c0_i32 = arith.constant 0 : i32
    %c0_i32_0 = arith.constant 0 : i32
    return %c0_i32, %arg0 : i32, i32
  }
}

</mosaic_0001>

<llo_original>
// kernel: resnet_forward.1
$region0: #{resnet_forward.1}
  #allocation0 [shape = 'u32[]', space=smem, size = 0x4, offset = 0x4, fixed_abs, tag = 'smem constant byte address 0x4 - core index']
  #allocation1 [shape = 'u32[144,128]{1,0:T(1,128)}', space=vmem, size = 0x12000, scoped, tag = 'internal scratch']
  #allocation2 [shape = 'f32[128,128]{1,0:T(8,128)}', space=vmem, size = 0x10000, scoped, tag = 'scratch operand']
  #allocation3 [shape = 'f32[128,128]{1,0:T(8,128)}', space=vmem, size = 0x10000, scoped, tag = 'scratch operand']
  #allocation4 [shape = 'f32[1,1]{1,0:T(1,128)S(1)}', space=vmem, size = 0x200, scoped, tag = 'scoped memory for resnet_forward.1']
  %s0 = inlined_call_operand.vmem [shape: bf16[256,256], index: 0, kind: input, shape index: {}]
  %s1 = inlined_call_operand.vmem [shape: bf16[256,128], index: 1, kind: input, shape index: {}]
  %s2 = inlined_call_operand.vmem [shape: f32[1,128], index: 2, kind: input, shape index: {}]
  %s3 = inlined_call_operand.vmem [shape: bf16[4,128,128], index: 3, kind: input, shape index: {}]
  %s4 = inlined_call_operand.vmem [shape: f32[4,1,128], index: 4, kind: input, shape index: {}]
  %s5 = inlined_call_operand.vmem [shape: bf16[4,128,128], index: 5, kind: input, shape index: {}]
  %s6 = inlined_call_operand.vmem [shape: f32[4,1,128], index: 6, kind: input, shape index: {}]
  %s7 = inlined_call_operand.vmem [shape: bf16[4,256,128], index: 7, kind: input, shape index: {}]
  %s8 = inlined_call_operand.vmem [shape: f32[4,1,128], index: 8, kind: input, shape index: {}]
  %s9 = inlined_call_operand.vmem [shape: bf16[1,128], index: 9, kind: input, shape index: {}]
  %s10 = inlined_call_operand.<no memory space> [shape: f32[1,1], index: 10, kind: input, shape index: {}]
  %s11 = inlined_call_operand.hbm [shape: f32[1,256], index: 11, kind: output, shape index: {}]
  %s12 = sld [smem:[#allocation0]]
  $region89: #{resnet_forward.1} parent=0
    _
  %s14 = ssub.s32 1, %s12
  %s15 = scalar_select 0, %s14, %s12
  %v16 = vstv %s10
  %17 = vst [vmem:[#allocation4] sm:$0x1] %v16
  $region1: #{resnet_forward.1} parent=0
    #allocation5 [shape = 'u8[1024]{0}', space=vmem, size = 0x400, scoped, tag = 'output window, operand 0']
    #allocation6 [shape = 's32[2]{0}', space=sflag, size = 0x8, scoped, tag = 'scoped memory for resnet_forward.1']
    %18 = vsyncpa [#allocation6], 0
    %s19 = scalar_lea.sflag [#allocation6], 1
    %20 = vsyncpa %s19, 0
    loop: start=0, step=1, limit=10
    $region2: #{resnet_forward.1} parent=1 // loop_pre_header
      _
    $region3: #{resnet_forward.1} parent=1 // loop_header
      %s22 = sphi 0, %s26
      %p23 = scmp.ge.s32.totalorder %s22, 10
      %s29 = sphi 0, %s41
      %s30 = sphi 0, %s37
      %s31 = sphi 0, %s29
      %s32 = sphi 0, %s30
      %s33 = sphi 0, %s31
      %s34 = sphi 0, %s32
      %s44 = sphi 0, %s46
      %s47 = sphi 0, %s44
      %s48 = sphi 0, %s47
      %s64 = sphi 0, %s48
      %s68 = sphi 0, %s68
      %s70 = sphi 0, %s68
      %s71 = sphi 0, %s70
      %s85 = sphi 0, %s71
      %s89 = sphi 0, %s89
      %s91 = sphi 0, %s89
      %s92 = sphi 0, %s91
      %s106 = sphi 0, %s92
      %s112 = sphi 0, %s114
      %s115 = sphi 0, %s112
      %s116 = sphi 0, %s115
      %s132 = sphi 0, %s116
      %s138 = sphi 0, %s140
      %s141 = sphi 0, %s138
      %s142 = sphi 0, %s141
      %s158 = sphi 0, %s142
      %s164 = sphi 0, %s166
      %s167 = sphi 0, %s164
      %s168 = sphi 0, %s167
      %s184 = sphi 0, %s168
      %s190 = sphi 0, %s192
      %s193 = sphi 0, %s190
      %s194 = sphi 0, %s193
      %s210 = sphi 0, %s194
      %s216 = sphi 0, %s218
      %s219 = sphi 0, %s216
      %s220 = sphi 0, %s219
      %s236 = sphi 0, %s220
      %s242 = sphi 0, %s244
      %s245 = sphi 0, %s242
      %s246 = sphi 0, %s245
      %s262 = sphi 0, %s246
      %s266 = sphi 0, %s266
      %s268 = sphi 0, %s266
      %s269 = sphi 0, %s268
      %s283 = sphi 0, %s269
      %s287 = sphi 0, %s287
      %s289 = sphi 0, %s287
      %s290 = sphi 0, %s289
      %s304 = sphi 0, %s290
      %s310 = sphi 0, %s312
      %s313 = sphi 0, %s310
      %s314 = sphi 0, %s313
      %s330 = sphi 0, %s314
    $region4: #{resnet_forward.1} parent=1 // loop_header_branch
      %25 = sbr.rel (%p23) target = $region8
    $region5: #{resnet_forward.1} parent=1 // loop_body
      %s27 = ssub.s32 %s22, 1
      %s28 = ssub.s32 %s22, 2
      %s35 = sadd.s32 1, %s30
      %p36 = scmp.ge.s32.totalorder %s35, 4
      %s37 = scalar_select %p36, 0, %s35
      %s38 = sadd.s32 1, %s29
      %s39 = scalar_select %p36, %s38, %s29
      %p40 = scmp.ge.s32.totalorder %s39, 2
      %s41 = scalar_select %p40, 0, %s39
      %s42 = ssub.s32 %s29, %s41
      %p43 = scmp.eq.s32.totalorder %s42, 0
      %s45 = sadd.s32 %s44, 1
      %s46 = scalar_select %p43, %s44, %s45
      %p49 = pneg %p43
      %p50 = scmp.eq.s32.totalorder %s22, 7
      %p51 = por %p49, %p50
      %p52 = scmp.ne.s32.totalorder %s44, %s47
      %p53 = scmp.eq.s32.totalorder %s22, 0
      %p54 = por %p52, %p53
      %p55 = scmp.ne.s32.totalorder %s44, %s47
      %p56 = scmp.eq.s32.totalorder %s27, 7
      %p57 = por %p55, %p56
      %p58 = scmp.ne.s32.totalorder %s47, %s48
      %p59 = scmp.eq.s32.totalorder %s27, 0
      %p60 = por %p58, %p59
      %p61 = scmp.ne.s32.totalorder %s47, %s48
      %p62 = scmp.eq.s32.totalorder %s28, 7
      %p63 = por %p61, %p62
      %p65 = scmp.ne.s32.totalorder %s48, %s64
      %p66 = scmp.eq.s32.totalorder %s28, 0
      %p67 = por %p65, %p66
      %s69 = sadd.s32 %s68, 1
      %p72 = scmp.eq.s32.totalorder %s22, 7
      %p73 = scmp.ne.s32.totalorder %s68, %s70
      %p74 = scmp.eq.s32.totalorder %s22, 0
      %p75 = por %p73, %p74
      %p76 = scmp.ne.s32.totalorder %s68, %s70
      %p77 = scmp.eq.s32.totalorder %s27, 7
      %p78 = por %p76, %p77
      %p79 = scmp.ne.s32.totalorder %s70, %s71
      %p80 = scmp.eq.s32.totalorder %s27, 0
      %p81 = por %p79, %p80
      %p82 = scmp.ne.s32.totalorder %s70, %s71
      %p83 = scmp.eq.s32.totalorder %s28, 7
      %p84 = por %p82, %p83
      %p86 = scmp.ne.s32.totalorder %s71, %s85
      %p87 = scmp.eq.s32.totalorder %s28, 0
      %p88 = por %p86, %p87
      %s90 = sadd.s32 %s89, 1
      %p93 = scmp.eq.s32.totalorder %s22, 7
      %p94 = scmp.ne.s32.totalorder %s89, %s91
      %p95 = scmp.eq.s32.totalorder %s22, 0
      %p96 = por %p94, %p95
      %p97 = scmp.ne.s32.totalorder %s89, %s91
      %p98 = scmp.eq.s32.totalorder %s27, 7
      %p99 = por %p97, %p98
      %p100 = scmp.ne.s32.totalorder %s91, %s92
      %p101 = scmp.eq.s32.totalorder %s27, 0
      %p102 = por %p100, %p101
      %p103 = scmp.ne.s32.totalorder %s91, %s92
      %p104 = scmp.eq.s32.totalorder %s28, 7
      %p105 = por %p103, %p104
      %p107 = scmp.ne.s32.totalorder %s92, %s106
      %p108 = scmp.eq.s32.totalorder %s28, 0
      %p109 = por %p107, %p108
      %s110 = ssub.s32 %s30, %s37
      %p111 = scmp.eq.s32.totalorder %s110, 0
      %s113 = sadd.s32 %s112, 1
      %s114 = scalar_select %p111, %s112, %s113
      %p117 = pneg %p111
      %p118 = scmp.eq.s32.totalorder %s22, 7
      %p119 = por %p117, %p118
      %p120 = scmp.ne.s32.totalorder %s112, %s115
      %p121 = scmp.eq.s32.totalorder %s22, 0
      %p122 = por %p120, %p121
      %p123 = scmp.ne.s32.totalorder %s112, %s115
      %p124 = scmp.eq.s32.totalorder %s27, 7
      %p125 = por %p123, %p124
      %p126 = scmp.ne.s32.totalorder %s115, %s116
      %p127 = scmp.eq.s32.totalorder %s27, 0
      %p128 = por %p126, %p127
      %p129 = scmp.ne.s32.totalorder %s115, %s116
      %p130 = scmp.eq.s32.totalorder %s28, 7
      %p131 = por %p129, %p130
      %p133 = scmp.ne.s32.totalorder %s116, %s132
      %p134 = scmp.eq.s32.totalorder %s28, 0
      %p135 = por %p133, %p134
      %s136 = ssub.s32 %s30, %s37
      %p137 = scmp.eq.s32.totalorder %s136, 0
      %s139 = sadd.s32 %s138, 1
      %s140 = scalar_select %p137, %s138, %s139
      %p143 = pneg %p137
      %p144 = scmp.eq.s32.totalorder %s22, 7
      %p145 = por %p143, %p144
      %p146 = scmp.ne.s32.totalorder %s138, %s141
      %p147 = scmp.eq.s32.totalorder %s22, 0
      %p148 = por %p146, %p147
      %p149 = scmp.ne.s32.totalorder %s138, %s141
      %p150 = scmp.eq.s32.totalorder %s27, 7
      %p151 = por %p149, %p150
      %p152 = scmp.ne.s32.totalorder %s141, %s142
      %p153 = scmp.eq.s32.totalorder %s27, 0
      %p154 = por %p152, %p153
      %p155 = scmp.ne.s32.totalorder %s141, %s142
      %p156 = scmp.eq.s32.totalorder %s28, 7
      %p157 = por %p155, %p156
      %p159 = scmp.ne.s32.totalorder %s142, %s158
      %p160 = scmp.eq.s32.totalorder %s28, 0
      %p161 = por %p159, %p160
      %s162 = ssub.s32 %s30, %s37
      %p163 = scmp.eq.s32.totalorder %s162, 0
      %s165 = sadd.s32 %s164, 1
      %s166 = scalar_select %p163, %s164, %s165
      %p169 = pneg %p163
      %p170 = scmp.eq.s32.totalorder %s22, 7
      %p171 = por %p169, %p170
      %p172 = scmp.ne.s32.totalorder %s164, %s167
      %p173 = scmp.eq.s32.totalorder %s22, 0
      %p174 = por %p172, %p173
      %p175 = scmp.ne.s32.totalorder %s164, %s167
      %p176 = scmp.eq.s32.totalorder %s27, 7
      %p177 = por %p175, %p176
      %p178 = scmp.ne.s32.totalorder %s167, %s168
      %p179 = scmp.eq.s32.totalorder %s27, 0
      %p180 = por %p178, %p179
      %p181 = scmp.ne.s32.totalorder %s167, %s168
      %p182 = scmp.eq.s32.totalorder %s28, 7
      %p183 = por %p181, %p182
      %p185 = scmp.ne.s32.totalorder %s168, %s184
      %p186 = scmp.eq.s32.totalorder %s28, 0
      %p187 = por %p185, %p186
      %s188 = ssub.s32 %s30, %s37
      %p189 = scmp.eq.s32.totalorder %s188, 0
      %s191 = sadd.s32 %s190, 1
      %s192 = scalar_select %p189, %s190, %s191
      %p195 = pneg %p189
      %p196 = scmp.eq.s32.totalorder %s22, 7
      %p197 = por %p195, %p196
      %p198 = scmp.ne.s32.totalorder %s190, %s193
      %p199 = scmp.eq.s32.totalorder %s22, 0
      %p200 = por %p198, %p199
      %p201 = scmp.ne.s32.totalorder %s190, %s193
      %p202 = scmp.eq.s32.totalorder %s27, 7
      %p203 = por %p201, %p202
      %p204 = scmp.ne.s32.totalorder %s193, %s194
      %p205 = scmp.eq.s32.totalorder %s27, 0
      %p206 = por %p204, %p205
      %p207 = scmp.ne.s32.totalorder %s193, %s194
      %p208 = scmp.eq.s32.totalorder %s28, 7
      %p209 = por %p207, %p208
      %p211 = scmp.ne.s32.totalorder %s194, %s210
      %p212 = scmp.eq.s32.totalorder %s28, 0
      %p213 = por %p211, %p212
      %s214 = ssub.s32 %s30, %s37
      %p215 = scmp.eq.s32.totalorder %s214, 0
      %s217 = sadd.s32 %s216, 1
      %s218 = scalar_select %p215, %s216, %s217
      %p221 = pneg %p215
      %p222 = scmp.eq.s32.totalorder %s22, 7
      %p223 = por %p221, %p222
      %p224 = scmp.ne.s32.totalorder %s216, %s219
      %p225 = scmp.eq.s32.totalorder %s22, 0
      %p226 = por %p224, %p225
      %p227 = scmp.ne.s32.totalorder %s216, %s219
      %p228 = scmp.eq.s32.totalorder %s27, 7
      %p229 = por %p227, %p228
      %p230 = scmp.ne.s32.totalorder %s219, %s220
      %p231 = scmp.eq.s32.totalorder %s27, 0
      %p232 = por %p230, %p231
      %p233 = scmp.ne.s32.totalorder %s219, %s220
      %p234 = scmp.eq.s32.totalorder %s28, 7
      %p235 = por %p233, %p234
      %p237 = scmp.ne.s32.totalorder %s220, %s236
      %p238 = scmp.eq.s32.totalorder %s28, 0
      %p239 = por %p237, %p238
      %s240 = ssub.s32 %s30, %s37
      %p241 = scmp.eq.s32.totalorder %s240, 0
      %s243 = sadd.s32 %s242, 1
      %s244 = scalar_select %p241, %s242, %s243
      %p247 = pneg %p241
      %p248 = scmp.eq.s32.totalorder %s22, 7
      %p249 = por %p247, %p248
      %p250 = scmp.ne.s32.totalorder %s242, %s245
      %p251 = scmp.eq.s32.totalorder %s22, 0
      %p252 = por %p250, %p251
      %p253 = scmp.ne.s32.totalorder %s242, %s245
      %p254 = scmp.eq.s32.totalorder %s27, 7
      %p255 = por %p253, %p254
      %p256 = scmp.ne.s32.totalorder %s245, %s246
      %p257 = scmp.eq.s32.totalorder %s27, 0
      %p258 = por %p256, %p257
      %p259 = scmp.ne.s32.totalorder %s245, %s246
      %p260 = scmp.eq.s32.totalorder %s28, 7
      %p261 = por %p259, %p260
      %p263 = scmp.ne.s32.totalorder %s246, %s262
      %p264 = scmp.eq.s32.totalorder %s28, 0
      %p265 = por %p263, %p264
      %s267 = sadd.s32 %s266, 1
      %p270 = scmp.eq.s32.totalorder %s22, 7
      %p271 = scmp.ne.s32.totalorder %s266, %s268
      %p272 = scmp.eq.s32.totalorder %s22, 0
      %p273 = por %p271, %p272
      %p274 = scmp.ne.s32.totalorder %s266, %s268
      %p275 = scmp.eq.s32.totalorder %s27, 7
      %p276 = por %p274, %p275
      %p277 = scmp.ne.s32.totalorder %s268, %s269
      %p278 = scmp.eq.s32.totalorder %s27, 0
      %p279 = por %p277, %p278
      %p280 = scmp.ne.s32.totalorder %s268, %s269
      %p281 = scmp.eq.s32.totalorder %s28, 7
      %p282 = por %p280, %p281
      %p284 = scmp.ne.s32.totalorder %s269, %s283
      %p285 = scmp.eq.s32.totalorder %s28, 0
      %p286 = por %p284, %p285
      %s288 = sadd.s32 %s287, 1
      %p291 = scmp.eq.s32.totalorder %s22, 7
      %p292 = scmp.ne.s32.totalorder %s287, %s289
      %p293 = scmp.eq.s32.totalorder %s22, 0
      %p294 = por %p292, %p293
      %p295 = scmp.ne.s32.totalorder %s287, %s289
      %p296 = scmp.eq.s32.totalorder %s27, 7
      %p297 = por %p295, %p296
      %p298 = scmp.ne.s32.totalorder %s289, %s290
      %p299 = scmp.eq.s32.totalorder %s27, 0
      %p300 = por %p298, %p299
      %p301 = scmp.ne.s32.totalorder %s289, %s290
      %p302 = scmp.eq.s32.totalorder %s28, 7
      %p303 = por %p301, %p302
      %p305 = scmp.ne.s32.totalorder %s290, %s304
      %p306 = scmp.eq.s32.totalorder %s28, 0
      %p307 = por %p305, %p306
      %s308 = ssub.s32 %s29, %s41
      %p309 = scmp.eq.s32.totalorder %s308, 0
      %s311 = sadd.s32 %s310, 1
      %s312 = scalar_select %p309, %s310, %s311
      %p315 = pneg %p309
      %p316 = scmp.eq.s32.totalorder %s22, 7
      %p317 = por %p315, %p316
      %p318 = scmp.ne.s32.totalorder %s310, %s313
      %p319 = scmp.eq.s32.totalorder %s22, 0
      %p320 = por %p318, %p319
      %p321 = scmp.ne.s32.totalorder %s310, %s313
      %p322 = scmp.eq.s32.totalorder %s27, 7
      %p323 = por %p321, %p322
      %p324 = scmp.ne.s32.totalorder %s313, %s314
      %p325 = scmp.eq.s32.totalorder %s27, 0
      %p326 = por %p324, %p325
      %p327 = scmp.ne.s32.totalorder %s313, %s314
      %p328 = scmp.eq.s32.totalorder %s28, 7
      %p329 = por %p327, %p328
      %p331 = scmp.ne.s32.totalorder %s314, %s330
      %p332 = scmp.eq.s32.totalorder %s28, 0
      %p333 = por %p331, %p332
      %p334 = scmp.le.s32.totalorder 1, %s22
      %p335 = scmp.lt.s32.totalorder %s22, 9
      %p336 = pnand %p334, %p335
      %p337 = pneg %p336
      // Predicated region
      $region9: #{resnet_forward.1} parent=5 // pred_check
        _
      $region10: #{resnet_forward.1} parent=5 // pred_check_branch
        %339 = sbr.rel (%p336) target = $region12
      $region11: #{resnet_forward.1} parent=5 // pred_region
        %s340 = ssub.s32 %s22, 1
        // Predicated region
        $region13: #{resnet_forward.1} parent=11 // pred_check
          %p341 = pneg %p81
        $region14: #{resnet_forward.1} parent=11 // pred_check_branch
          %343 = sbr.rel (%p341) target = $region16
        $region15: #{resnet_forward.1} parent=11 // pred_region
          _
        $region16: #{resnet_forward.1} parent=11 // pred_fallthru
          _
        // Predicated region
        $region17: #{resnet_forward.1} parent=11 // pred_check
          %p344 = pneg %p102
        $region18: #{resnet_forward.1} parent=11 // pred_check_branch
          %346 = sbr.rel (%p344) target = $region20
        $region19: #{resnet_forward.1} parent=11 // pred_region
          _
        $region20: #{resnet_forward.1} parent=11 // pred_fallthru
          _
        // Predicated region
        $region21: #{resnet_forward.1} parent=11 // pred_check
          %p347 = pneg %p279
        $region22: #{resnet_forward.1} parent=11 // pred_check_branch
          %349 = sbr.rel (%p347) target = $region24
        $region23: #{resnet_forward.1} parent=11 // pred_region
          _
        $region24: #{resnet_forward.1} parent=11 // pred_fallthru
          _
        // Predicated region
        $region25: #{resnet_forward.1} parent=11 // pred_check
          %p350 = pneg %p300
        $region26: #{resnet_forward.1} parent=11 // pred_check_branch
          %352 = sbr.rel (%p350) target = $region28
        $region27: #{resnet_forward.1} parent=11 // pred_region
          _
        $region28: #{resnet_forward.1} parent=11 // pred_fallthru
          _
      $region12: #{resnet_forward.1} parent=5 // pred_fallthru
        _
      %p353 = scmp.lt.s32.totalorder %s22, 8
      // Predicated region
      $region29: #{resnet_forward.1} parent=5 // pred_check
        %p354 = pneg %p353
      $region30: #{resnet_forward.1} parent=5 // pred_check_branch
        %356 = sbr.rel (%p354) target = $region32
      $region31: #{resnet_forward.1} parent=5 // pred_region
        // Predicated region
        $region33: #{resnet_forward.1} parent=31 // pred_check
          %p357 = pneg %p54
        $region34: #{resnet_forward.1} parent=31 // pred_check_branch
          %359 = sbr.rel (%p357) target = $region36
        $region35: #{resnet_forward.1} parent=31 // pred_region
          %s360 = smul.u32 16, %s29
          %p361 = scmp.lt.s32.totalorder %s360, 31
          %s362 = scalar_select %p361, %s360, 31
          %s363 = smul.addr %s362, 2
          %s364 = smul.addr %s363, 4
          %s365 = scalar_lea.vmem %s0, %s364
          %s366 = smul.u32 16, %s29
        $region36: #{resnet_forward.1} parent=31 // pred_fallthru
          _
        // Predicated region
        $region37: #{resnet_forward.1} parent=31 // pred_check
          %p367 = pneg %p122
        $region38: #{resnet_forward.1} parent=31 // pred_check_branch
          %369 = sbr.rel (%p367) target = $region40
        $region39: #{resnet_forward.1} parent=31 // pred_region
          %p370 = scmp.lt.s32.totalorder %s30, 3
          %s371 = scalar_select %p370, %s30, 3
          %s372 = smul.addr %s371, 16
          %s373 = smul.addr %s372, 4
          %s374 = scalar_lea.vmem %s3, %s373
        $region40: #{resnet_forward.1} parent=31 // pred_fallthru
          _
        // Predicated region
        $region41: #{resnet_forward.1} parent=31 // pred_check
          %p375 = pneg %p148
        $region42: #{resnet_forward.1} parent=31 // pred_check_branch
          %377 = sbr.rel (%p375) target = $region44
        $region43: #{resnet_forward.1} parent=31 // pred_region
          %p378 = scmp.lt.s32.totalorder %s30, 3
          %s379 = scalar_select %p378, %s30, 3
          %s380 = scalar_lea.vmem %s4, %s379
        $region44: #{resnet_forward.1} parent=31 // pred_fallthru
          _
        // Predicated region
        $region45: #{resnet_forward.1} parent=31 // pred_check
          %p381 = pneg %p174
        $region46: #{resnet_forward.1} parent=31 // pred_check_branch
          %383 = sbr.rel (%p381) target = $region48
        $region47: #{resnet_forward.1} parent=31 // pred_region
          %p384 = scmp.lt.s32.totalorder %s30, 3
          %s385 = scalar_select %p384, %s30, 3
          %s386 = smul.addr %s385, 16
          %s387 = smul.addr %s386, 4
          %s388 = scalar_lea.vmem %s5, %s387
        $region48: #{resnet_forward.1} parent=31 // pred_fallthru
          _
        // Predicated region
        $region49: #{resnet_forward.1} parent=31 // pred_check
          %p389 = pneg %p200
        $region50: #{resnet_forward.1} parent=31 // pred_check_branch
          %391 = sbr.rel (%p389) target = $region52
        $region51: #{resnet_forward.1} parent=31 // pred_region
          %p392 = scmp.lt.s32.totalorder %s30, 3
          %s393 = scalar_select %p392, %s30, 3
          %s394 = scalar_lea.vmem %s6, %s393
        $region52: #{resnet_forward.1} parent=31 // pred_fallthru
          _
        // Predicated region
        $region53: #{resnet_forward.1} parent=31 // pred_check
          %p395 = pneg %p226
        $region54: #{resnet_forward.1} parent=31 // pred_check_branch
          %397 = sbr.rel (%p395) target = $region56
        $region55: #{resnet_forward.1} parent=31 // pred_region
          %p398 = scmp.lt.s32.totalorder %s30, 3
          %s399 = scalar_select %p398, %s30, 3
          %s400 = smul.addr %s399, 32
          %s401 = smul.addr %s400, 4
          %s402 = scalar_lea.vmem %s7, %s401
        $region56: #{resnet_forward.1} parent=31 // pred_fallthru
          _
        // Predicated region
        $region57: #{resnet_forward.1} parent=31 // pred_check
          %p403 = pneg %p252
        $region58: #{resnet_forward.1} parent=31 // pred_check_branch
          %405 = sbr.rel (%p403) target = $region60
        $region59: #{resnet_forward.1} parent=31 // pred_region
          %p406 = scmp.lt.s32.totalorder %s30, 3
          %s407 = scalar_select %p406, %s30, 3
          %s408 = scalar_lea.vmem %s8, %s407
        $region60: #{resnet_forward.1} parent=31 // pred_fallthru
          _
      $region32: #{resnet_forward.1} parent=5 // pred_fallthru
        _
      %p409 = scmp.le.s32.totalorder 1, %s22
      %p410 = scmp.lt.s32.totalorder %s22, 9
      %p411 = pnand %p409, %p410
      %p412 = pneg %p411
      // Predicated region
      $region61: #{resnet_forward.1} parent=5 // pred_check
        _
      $region62: #{resnet_forward.1} parent=5 // pred_check_branch
        %414 = sbr.rel (%p411) target = $region64
      $region63: #{resnet_forward.1} parent=5 // pred_region
        %s415 = ssub.s32 %s22, 1
        %s416 = smul.u32 16, %s31
        %p417 = scmp.lt.s32.totalorder %s416, 31
        %s418 = scalar_select %p417, %s416, 31
        %s419 = smul.addr %s418, 2
        %s420 = smul.addr %s419, 4
        %s421 = scalar_lea.vmem %s0, %s420
        %p422 = pneg %p60
        %p423 = pneg %p57
        %p424 = pneg %p81
        %p425 = pneg %p78
        %p426 = pneg %p102
        %p427 = pneg %p99
        %p428 = scmp.lt.s32.totalorder %s32, 3
        %s429 = scalar_select %p428, %s32, 3
        %s430 = smul.addr %s429, 16
        %s431 = smul.addr %s430, 4
        %s432 = scalar_lea.vmem %s3, %s431
        %p433 = pneg %p128
        %p434 = pneg %p125
        %p435 = scmp.lt.s32.totalorder %s32, 3
        %s436 = scalar_select %p435, %s32, 3
        %s437 = scalar_lea.vmem %s4, %s436
        %p438 = pneg %p154
        %p439 = pneg %p151
        %p440 = scmp.lt.s32.totalorder %s32, 3
        %s441 = scalar_select %p440, %s32, 3
        %s442 = smul.addr %s441, 16
        %s443 = smul.addr %s442, 4
        %s444 = scalar_lea.vmem %s5, %s443
        %p445 = pneg %p180
        %p446 = pneg %p177
        %p447 = scmp.lt.s32.totalorder %s32, 3
        %s448 = scalar_select %p447, %s32, 3
        %s449 = scalar_lea.vmem %s6, %s448
        %p450 = pneg %p206
        %p451 = pneg %p203
        %p452 = scmp.lt.s32.totalorder %s32, 3
        %s453 = scalar_select %p452, %s32, 3
        %s454 = smul.addr %s453, 32
        %s455 = smul.addr %s454, 4
        %s456 = scalar_lea.vmem %s7, %s455
        %p457 = pneg %p232
        %p458 = pneg %p229
        %p459 = scmp.lt.s32.totalorder %s32, 3
        %s460 = scalar_select %p459, %s32, 3
        %s461 = scalar_lea.vmem %s8, %s460
        %p462 = pneg %p258
        %p463 = pneg %p255
        %p464 = pneg %p279
        %p465 = pneg %p276
        %p466 = pneg %p300
        %p467 = pneg %p297
        %p468 = pneg %p326
        %p469 = pneg %p323
        %s470 = sand.u32 %s313, 1
        %s471 = scalar_lea.sflag [#allocation6], %s470
        %s472 = sand.u32 %s313, 1
        %s473 = scalar_lea.vmem [#allocation5], %s472
        %s474 = smul.u32 16, %s31
        %p475 = scmp.lt.s32.totalorder %s474, 31
        %s476 = scalar_select %p475, %s474, 31
        %s477 = smul.addr %s476, 2
        %s478 = smul.addr %s477, 4
        %s479 = scalar_lea.vmem %s0, %s478
        %s480 = smul.u32 16, %s31
        %p481 = scmp.lt.s32.totalorder %s32, 3
        %s482 = scalar_select %p481, %s32, 3
        %s483 = smul.addr %s482, 16
        %s484 = smul.addr %s483, 4
        %s485 = scalar_lea.vmem %s3, %s484
        %p486 = scmp.lt.s32.totalorder %s32, 3
        %s487 = scalar_select %p486, %s32, 3
        %s488 = scalar_lea.vmem %s4, %s487
        %p489 = scmp.lt.s32.totalorder %s32, 3
        %s490 = scalar_select %p489, %s32, 3
        %s491 = smul.addr %s490, 16
        %s492 = smul.addr %s491, 4
        %s493 = scalar_lea.vmem %s5, %s492
        %p494 = scmp.lt.s32.totalorder %s32, 3
        %s495 = scalar_select %p494, %s32, 3
        %s496 = scalar_lea.vmem %s6, %s495
        %p497 = scmp.lt.s32.totalorder %s32, 3
        %s498 = scalar_select %p497, %s32, 3
        %s499 = smul.addr %s498, 32
        %s500 = smul.addr %s499, 4
        %s501 = scalar_lea.vmem %s7, %s500
        %p502 = scmp.lt.s32.totalorder %s32, 3
        %s503 = scalar_select %p502, %s32, 3
        %s504 = scalar_lea.vmem %s8, %s503
        %p506 = scmp.eq.s32.totalorder %s32, 0
        // Predicated region
        $region65: #{resnet_forward.1} parent=63 // pred_check
          %p507 = pneg %p506
        $region66: #{resnet_forward.1} parent=63 // pred_check_branch
          %509 = sbr.rel (%p507) target = $region68
        $region67: #{resnet_forward.1} parent=63 // pred_region
          %v510 = vld [vmem:[%s479] sm:$0xff]
          %v511 = vld [vmem:[%s479 + $0x8] sm:$0xff]
          %v512 = vld [vmem:[%s479 + $0x10] sm:$0xff]
          %v513 = vld [vmem:[%s479 + $0x18] sm:$0xff]
          %v514 = vld [vmem:[%s479 + $0x20] sm:$0xff]
          %v515 = vld [vmem:[%s479 + $0x28] sm:$0xff]
          %v516 = vld [vmem:[%s479 + $0x30] sm:$0xff]
          %v517 = vld [vmem:[%s479 + $0x38] sm:$0xff]
          %v518 = vld [vmem:[%s479 + $0x40] sm:$0xff]
          %v519 = vld [vmem:[%s479 + $0x48] sm:$0xff]
          %v520 = vld [vmem:[%s479 + $0x50] sm:$0xff]
          %v521 = vld [vmem:[%s479 + $0x58] sm:$0xff]
          %v522 = vld [vmem:[%s479 + $0x60] sm:$0xff]
          %v523 = vld [vmem:[%s479 + $0x68] sm:$0xff]
          %v524 = vld [vmem:[%s479 + $0x70] sm:$0xff]
          %v525 = vld [vmem:[%s479 + $0x78] sm:$0xff]
          %v526 = vld [vmem:[%s1] sm:$0xf]
          %v527 = vld [vmem:[%s1 + $0x4] sm:$0xf]
          %v528 = vld [vmem:[%s1 + $0x8] sm:$0xf]
          %v529 = vld [vmem:[%s1 + $0xc] sm:$0xf]
          %v530 = vld [vmem:[%s1 + $0x10] sm:$0xf]
          %v531 = vld [vmem:[%s1 + $0x14] sm:$0xf]
          %v532 = vld [vmem:[%s1 + $0x18] sm:$0xf]
          %v533 = vld [vmem:[%s1 + $0x1c] sm:$0xf]
          %v534 = vld [vmem:[%s1 + $0x20] sm:$0xf]
          %v535 = vld [vmem:[%s1 + $0x24] sm:$0xf]
          %v536 = vld [vmem:[%s1 + $0x28] sm:$0xf]
          %v537 = vld [vmem:[%s1 + $0x2c] sm:$0xf]
          %v538 = vld [vmem:[%s1 + $0x30] sm:$0xf]
          %v539 = vld [vmem:[%s1 + $0x34] sm:$0xf]
          %v540 = vld [vmem:[%s1 + $0x38] sm:$0xf]
          %v541 = vld [vmem:[%s1 + $0x3c] sm:$0xf]
          %v542 = vld [vmem:[%s1 + $0x40] sm:$0xf]
          %v543 = vld [vmem:[%s1 + $0x44] sm:$0xf]
          %v544 = vld [vmem:[%s1 + $0x48] sm:$0xf]
          %v545 = vld [vmem:[%s1 + $0x4c] sm:$0xf]
          %v546 = vld [vmem:[%s1 + $0x50] sm:$0xf]
          %v547 = vld [vmem:[%s1 + $0x54] sm:$0xf]
          %v548 = vld [vmem:[%s1 + $0x58] sm:$0xf]
          %v549 = vld [vmem:[%s1 + $0x5c] sm:$0xf]
          %v550 = vld [vmem:[%s1 + $0x60] sm:$0xf]
          %v551 = vld [vmem:[%s1 + $0x64] sm:$0xf]
          %v552 = vld [vmem:[%s1 + $0x68] sm:$0xf]
          %v553 = vld [vmem:[%s1 + $0x6c] sm:$0xf]
          %v554 = vld [vmem:[%s1 + $0x70] sm:$0xf]
          %v555 = vld [vmem:[%s1 + $0x74] sm:$0xf]
          %v556 = vld [vmem:[%s1 + $0x78] sm:$0xf]
          %v557 = vld [vmem:[%s1 + $0x7c] sm:$0xf]
          %v558 = vld [vmem:[%s2] sm:$0x1]
          %v560 = vlaneseq
          %v561 = vshrl.u32 %v560, 7
          %v562 = vsub.s32 0, %v561
          %v563 = vrot.slane %v558, %v562
          %v581 = vunpack.c.l.b16 %v510
          %v582 = vunpack.c.h.b16 %v510
          %v583 = vunpack.c.l.b16 %v511
          %v584 = vunpack.c.h.b16 %v511
          %v585 = vunpack.c.l.b16 %v512
          %v586 = vunpack.c.h.b16 %v512
          %v587 = vunpack.c.l.b16 %v513
          %v588 = vunpack.c.h.b16 %v513
          %v589 = vunpack.c.l.b16 %v514
          %v590 = vunpack.c.h.b16 %v514
          %v591 = vunpack.c.l.b16 %v515
          %v592 = vunpack.c.h.b16 %v515
          %v593 = vunpack.c.l.b16 %v516
          %v594 = vunpack.c.h.b16 %v516
          %v595 = vunpack.c.l.b16 %v517
          %v596 = vunpack.c.h.b16 %v517
          %v597 = vunpack.c.l.b16 %v518
          %v598 = vunpack.c.h.b16 %v518
          %v599 = vunpack.c.l.b16 %v519
          %v600 = vunpack.c.h.b16 %v519
          %v601 = vunpack.c.l.b16 %v520
          %v602 = vunpack.c.h.b16 %v520
          %v603 = vunpack.c.l.b16 %v521
          %v604 = vunpack.c.h.b16 %v521
          %v605 = vunpack.c.l.b16 %v522
          %v606 = vunpack.c.h.b16 %v522
          %v607 = vunpack.c.l.b16 %v523
          %v608 = vunpack.c.h.b16 %v523
          %v609 = vunpack.c.l.b16 %v524
          %v610 = vunpack.c.h.b16 %v524
          %v611 = vunpack.c.l.b16 %v525
          %v612 = vunpack.c.h.b16 %v525
          %v613 = vpack.c.b16 %v583, %v581
          %v614 = vpack.c.b16 %v584, %v582
          %v615 = vpack.c.b16 %v587, %v585
          %v616 = vpack.c.b16 %v588, %v586
          %v617 = vpack.c.b16 %v591, %v589
          %v618 = vpack.c.b16 %v592, %v590
          %v619 = vpack.c.b16 %v595, %v593
          %v620 = vpack.c.b16 %v596, %v594
          %v621 = vpack.c.b16 %v599, %v597
          %v622 = vpack.c.b16 %v600, %v598
          %v623 = vpack.c.b16 %v603, %v601
          %v624 = vpack.c.b16 %v604, %v602
          %v625 = vpack.c.b16 %v607, %v605
          %v626 = vpack.c.b16 %v608, %v606
          %v627 = vpack.c.b16 %v611, %v609
          %v628 = vpack.c.b16 %v612, %v610
          %v677 = vunpack.c.l.b16 %v526
          %v678 = vunpack.c.l.b16 %v527
          %v679 = vunpack.c.l.b16 %v528
          %v680 = vunpack.c.l.b16 %v529
          %v681 = vunpack.c.l.b16 %v530
          %v682 = vunpack.c.l.b16 %v531
          %v683 = vunpack.c.l.b16 %v532
          %v684 = vunpack.c.l.b16 %v533
          %v685 = vunpack.c.l.b16 %v534
          %v686 = vunpack.c.l.b16 %v535
          %v687 = vunpack.c.l.b16 %v536
          %v688 = vunpack.c.l.b16 %v537
          %v689 = vunpack.c.l.b16 %v538
          %v690 = vunpack.c.l.b16 %v539
          %v691 = vunpack.c.l.b16 %v540
          %v692 = vunpack.c.l.b16 %v541
          %v693 = vunpack.c.l.b16 %v542
          %v694 = vunpack.c.l.b16 %v543
          %v695 = vunpack.c.l.b16 %v544
          %v696 = vunpack.c.l.b16 %v545
          %v697 = vunpack.c.l.b16 %v546
          %v698 = vunpack.c.l.b16 %v547
          %v699 = vunpack.c.l.b16 %v548
          %v700 = vunpack.c.l.b16 %v549
          %v701 = vunpack.c.l.b16 %v550
          %v702 = vunpack.c.l.b16 %v551
          %v703 = vunpack.c.l.b16 %v552
          %v704 = vunpack.c.l.b16 %v553
          %v705 = vunpack.c.l.b16 %v554
          %v706 = vunpack.c.l.b16 %v555
          %v707 = vunpack.c.l.b16 %v556
          %v708 = vunpack.c.l.b16 %v557
          %v709 = vpack.c.b16 %v678, %v677
          %v710 = vpack.c.b16 %v680, %v679
          %v711 = vpack.c.b16 %v682, %v681
          %v712 = vpack.c.b16 %v684, %v683
          %v713 = vpack.c.b16 %v686, %v685
          %v714 = vpack.c.b16 %v688, %v687
          %v715 = vpack.c.b16 %v690, %v689
          %v716 = vpack.c.b16 %v692, %v691
          %v717 = vpack.c.b16 %v694, %v693
          %v718 = vpack.c.b16 %v696, %v695
          %v719 = vpack.c.b16 %v698, %v697
          %v720 = vpack.c.b16 %v700, %v699
          %v721 = vpack.c.b16 %v702, %v701
          %v722 = vpack.c.b16 %v704, %v703
          %v723 = vpack.c.b16 %v706, %v705
          %v724 = vpack.c.b16 %v708, %v707
          %741 = vmatprep.subr.bf16.mxu0 0
          %742 = vmatpush1.bf16.msra.mxu0 %v709
          %743 = vmatprep.subr.bf16.mxu0 0
          %744 = vmatpush1.bf16.msra.mxu0 %v710
          %745 = vmatprep.subr.bf16.mxu0 0
          %746 = vmatpush1.bf16.msra.mxu0 %v711
          %747 = vmatprep.subr.bf16.mxu0 0
          %748 = vmatpush1.bf16.msra.mxu0 %v712
          %749 = vmatprep.subr.bf16.mxu0 0
          %750 = vmatpush1.bf16.msra.mxu0 %v713
          %751 = vmatprep.subr.bf16.mxu0 0
          %752 = vmatpush1.bf16.msra.mxu0 %v714
          %753 = vmatprep.subr.bf16.mxu0 0
          %754 = vmatpush1.bf16.msra.mxu0 %v715
          %755 = vmatprep.subr.bf16.mxu0 0
          %756 = vmatpush1.bf16.msra.mxu0 %v716
          %757 = vmatprep.subr.bf16.mxu0 0
          %758 = vmatpush1.bf16.msra.mxu0 %v717
          %759 = vmatprep.subr.bf16.mxu0 0
          %760 = vmatpush1.bf16.msra.mxu0 %v718
          %761 = vmatprep.subr.bf16.mxu0 0
          %762 = vmatpush1.bf16.msra.mxu0 %v719
          %763 = vmatprep.subr.bf16.mxu0 0
          %764 = vmatpush1.bf16.msra.mxu0 %v720
          %765 = vmatprep.subr.bf16.mxu0 0
          %766 = vmatpush1.bf16.msra.mxu0 %v721
          %767 = vmatprep.subr.bf16.mxu0 0
          %768 = vmatpush1.bf16.msra.mxu0 %v722
          %769 = vmatprep.subr.bf16.mxu0 0
          %770 = vmatpush1.bf16.msra.mxu0 %v723
          %771 = vmatprep.subr.bf16.mxu0 0
          %772 = vmatpush1.bf16.msra.mxu0 %v724
          %773 = vmatprep.mubr.bf16.mxu0 %v614
          %774 = vmatmul.mubr.bf16.gmra.mrb[0].mxu0 %v613
          %v775 = vpop.f32.mrb[0].mxu0
          %v776 = vadd.f32 %v563, %v775
          %v777 = vpop.f32.mrb[0].mxu0
          %v778 = vpop.f32.mrb[0].mxu0
          %v779 = vadd.f32 %v563, %v778
          %v780 = vpop.f32.mrb[0].mxu0
          %781 = vmatprep.mubr.bf16.mxu0 %v616
          %782 = vmatmul.mubr.bf16.gmra.mrb[0].mxu0 %v615
          %v783 = vpop.f32.mrb[0].mxu0
          %v784 = vadd.f32 %v563, %v783
          %v785 = vpop.f32.mrb[0].mxu0
          %v786 = vpop.f32.mrb[0].mxu0
          %v787 = vadd.f32 %v563, %v786
          %v788 = vpop.f32.mrb[0].mxu0
          %789 = vmatprep.mubr.bf16.mxu0 %v618
          %790 = vmatmul.mubr.bf16.gmra.mrb[0].mxu0 %v617
          %v791 = vpop.f32.mrb[0].mxu0
          %v792 = vadd.f32 %v563, %v791
          %v793 = vpop.f32.mrb[0].mxu0
          %v794 = vpop.f32.mrb[0].mxu0
          %v795 = vadd.f32 %v563, %v794
          %v796 = vpop.f32.mrb[0].mxu0
          %797 = vmatprep.mubr.bf16.mxu0 %v620
          %798 = vmatmul.mubr.bf16.gmra.mrb[0].mxu0 %v619
          %v799 = vpop.f32.mrb[0].mxu0
          %v800 = vadd.f32 %v563, %v799
          %v801 = vpop.f32.mrb[0].mxu0
          %v802 = vpop.f32.mrb[0].mxu0
          %v803 = vadd.f32 %v563, %v802
          %v804 = vpop.f32.mrb[0].mxu0
          %805 = vmatprep.mubr.bf16.mxu0 %v622
          %806 = vmatmul.mubr.bf16.gmra.mrb[0].mxu0 %v621
          %v807 = vpop.f32.mrb[0].mxu0
          %v808 = vadd.f32 %v563, %v807
          %v809 = vpop.f32.mrb[0].mxu0
          %v810 = vpop.f32.mrb[0].mxu0
          %v811 = vadd.f32 %v563, %v810
          %v812 = vpop.f32.mrb[0].mxu0
          %813 = vmatprep.mubr.bf16.mxu0 %v624
          %814 = vmatmul.mubr.bf16.gmra.mrb[0].mxu0 %v623
          %v815 = vpop.f32.mrb[0].mxu0
          %v816 = vadd.f32 %v563, %v815
          %v817 = vpop.f32.mrb[0].mxu0
          %v818 = vpop.f32.mrb[0].mxu0
          %v819 = vadd.f32 %v563, %v818
          %v820 = vpop.f32.mrb[0].mxu0
          %821 = vmatprep.mubr.bf16.mxu0 %v626
          %822 = vmatmul.mubr.bf16.gmra.mrb[0].mxu0 %v625
          %v823 = vpop.f32.mrb[0].mxu0
          %v824 = vadd.f32 %v563, %v823
          %v825 = vpop.f32.mrb[0].mxu0
          %v826 = vpop.f32.mrb[0].mxu0
          %v827 = vadd.f32 %v563, %v826
          %v828 = vpop.f32.mrb[0].mxu0
          %829 = vmatprep.mubr.bf16.mxu0 %v628
          %830 = vmatmul.mubr.bf16.gmra.mrb[0].mxu0 %v627
          %v831 = vpop.f32.mrb[0].mxu0
          %v832 = vadd.f32 %v563, %v831
          %v833 = vpop.f32.mrb[0].mxu0
          %v834 = vpop.f32.mrb[0].mxu0
          %v835 = vadd.f32 %v563, %v834
          %v836 = vpop.f32.mrb[0].mxu0
          %837 = vdwg.mxu0
          %v838 = vmax.f32 %v776, 0.0
          %v839 = vmax.f32 %v779, 0.0
          %v840 = vmax.f32 %v784, 0.0
          %v841 = vmax.f32 %v787, 0.0
          %v842 = vmax.f32 %v792, 0.0
          %v843 = vmax.f32 %v795, 0.0
          %v844 = vmax.f32 %v800, 0.0
          %v845 = vmax.f32 %v803, 0.0
          %v846 = vmax.f32 %v808, 0.0
          %v847 = vmax.f32 %v811, 0.0
          %v848 = vmax.f32 %v816, 0.0
          %v849 = vmax.f32 %v819, 0.0
          %v850 = vmax.f32 %v824, 0.0
          %v851 = vmax.f32 %v827, 0.0
          %v852 = vmax.f32 %v832, 0.0
          %v853 = vmax.f32 %v835, 0.0
          %854 = vst [vmem:[#allocation2] sm:$0xff] %v838
          %855 = vst [vmem:[#allocation2 + $0x8] sm:$0xff] %v839
          %856 = vst [vmem:[#allocation2 + $0x10] sm:$0xff] %v840
          %857 = vst [vmem:[#allocation2 + $0x18] sm:$0xff] %v841
          %858 = vst [vmem:[#allocation2 + $0x20] sm:$0xff] %v842
          %859 = vst [vmem:[#allocation2 + $0x28] sm:$0xff] %v843
          %860 = vst [vmem:[#allocation2 + $0x30] sm:$0xff] %v844
          %861 = vst [vmem:[#allocation2 + $0x38] sm:$0xff] %v845
          %862 = vst [vmem:[#allocation2 + $0x40] sm:$0xff] %v846
          %863 = vst [vmem:[#allocation2 + $0x48] sm:$0xff] %v847
          %864 = vst [vmem:[#allocation2 + $0x50] sm:$0xff] %v848
          %865 = vst [vmem:[#allocation2 + $0x58] sm:$0xff] %v849
          %866 = vst [vmem:[#allocation2 + $0x60] sm:$0xff] %v850
          %867 = vst [vmem:[#allocation2 + $0x68] sm:$0xff] %v851
          %868 = vst [vmem:[#allocation2 + $0x70] sm:$0xff] %v852
          %869 = vst [vmem:[#allocation2 + $0x78] sm:$0xff] %v853
          %870 = vst [vmem:[#allocation3] sm:$0xff] %v838
          %871 = vst [vmem:[#allocation3 + $0x8] sm:$0xff] %v839
          %872 = vst [vmem:[#allocation3 + $0x10] sm:$0xff] %v840
          %873 = vst [vmem:[#allocation3 + $0x18] sm:$0xff] %v841
          %874 = vst [vmem:[#allocation3 + $0x20] sm:$0xff] %v842
          %875 = vst [vmem:[#allocation3 + $0x28] sm:$0xff] %v843
          %876 = vst [vmem:[#allocation3 + $0x30] sm:$0xff] %v844
          %877 = vst [vmem:[#allocation3 + $0x38] sm:$0xff] %v845
          %878 = vst [vmem:[#allocation3 + $0x40] sm:$0xff] %v846
          %879 = vst [vmem:[#allocation3 + $0x48] sm:$0xff] %v847
          %880 = vst [vmem:[#allocation3 + $0x50] sm:$0xff] %v848
          %881 = vst [vmem:[#allocation3 + $0x58] sm:$0xff] %v849
          %882 = vst [vmem:[#allocation3 + $0x60] sm:$0xff] %v850
          %883 = vst [vmem:[#allocation3 + $0x68] sm:$0xff] %v851
          %884 = vst [vmem:[#allocation3 + $0x70] sm:$0xff] %v852
          %885 = vst [vmem:[#allocation3 + $0x78] sm:$0xff] %v853
        $region68: #{resnet_forward.1} parent=63 // pred_fallthru
          _
        %s886 = sadd.s32 %s32, 1
        %s887 = scvt.s32.f32 %s886
        %v888 = vld [vmem:[#allocation2] sm:$0xff]
        %v889 = vld [vmem:[#allocation2 + $0x8] sm:$0xff]
        %v890 = vld [vmem:[#allocation2 + $0x10] sm:$0xff]
        %v891 = vld [vmem:[#allocation2 + $0x18] sm:$0xff]
        %v892 = vld [vmem:[#allocation2 + $0x20] sm:$0xff]
        %v893 = vld [vmem:[#allocation2 + $0x28] sm:$0xff]
        %v894 = vld [vmem:[#allocation2 + $0x30] sm:$0xff]
        %v895 = vld [vmem:[#allocation2 + $0x38] sm:$0xff]
        %v896 = vld [vmem:[#allocation2 + $0x40] sm:$0xff]
        %v897 = vld [vmem:[#allocation2 + $0x48] sm:$0xff]
        %v898 = vld [vmem:[#allocation2 + $0x50] sm:$0xff]
        %v899 = vld [vmem:[#allocation2 + $0x58] sm:$0xff]
        %v900 = vld [vmem:[#allocation2 + $0x60] sm:$0xff]
        %v901 = vld [vmem:[#allocation2 + $0x68] sm:$0xff]
        %v902 = vld [vmem:[#allocation2 + $0x70] sm:$0xff]
        %v903 = vld [vmem:[#allocation2 + $0x78] sm:$0xff]
        %v904 = vstv %s887
        %v905 = vrcp.pop %v904
        %s906 = vtos %v905
        %v907 = vstv %s906
        %v908 = vmul.f32 %v888, %v907
        %v909 = vmul.f32 %v889, %v907
        %v910 = vmul.f32 %v890, %v907
        %v911 = vmul.f32 %v891, %v907
        %v912 = vmul.f32 %v892, %v907
        %v913 = vmul.f32 %v893, %v907
        %v914 = vmul.f32 %v894, %v907
        %v915 = vmul.f32 %v895, %v907
        %v916 = vmul.f32 %v896, %v907
        %v917 = vmul.f32 %v897, %v907
        %v918 = vmul.f32 %v898, %v907
        %v919 = vmul.f32 %v899, %v907
        %v920 = vmul.f32 %v900, %v907
        %v921 = vmul.f32 %v901, %v907
        %v922 = vmul.f32 %v902, %v907
        %v923 = vmul.f32 %v903, %v907
        %v924 = vld [vmem:[#allocation3] sm:$0xff]
        %v925 = vld [vmem:[#allocation3 + $0x8] sm:$0xff]
        %v926 = vld [vmem:[#allocation3 + $0x10] sm:$0xff]
        %v927 = vld [vmem:[#allocation3 + $0x18] sm:$0xff]
        %v928 = vld [vmem:[#allocation3 + $0x20] sm:$0xff]
        %v929 = vld [vmem:[#allocation3 + $0x28] sm:$0xff]
        %v930 = vld [vmem:[#allocation3 + $0x30] sm:$0xff]
        %v931 = vld [vmem:[#allocation3 + $0x38] sm:$0xff]
        %v932 = vld [vmem:[#allocation3 + $0x40] sm:$0xff]
        %v933 = vld [vmem:[#allocation3 + $0x48] sm:$0xff]
        %v934 = vld [vmem:[#allocation3 + $0x50] sm:$0xff]
        %v935 = vld [vmem:[#allocation3 + $0x58] sm:$0xff]
        %v936 = vld [vmem:[#allocation3 + $0x60] sm:$0xff]
        %v937 = vld [vmem:[#allocation3 + $0x68] sm:$0xff]
        %v938 = vld [vmem:[#allocation3 + $0x70] sm:$0xff]
        %v939 = vld [vmem:[#allocation3 + $0x78] sm:$0xff]
        %v940 = vld [vmem:[%s485] sm:$0xf]
        %v941 = vld [vmem:[%s485 + $0x4] sm:$0xf]
        %v942 = vld [vmem:[%s485 + $0x8] sm:$0xf]
        %v943 = vld [vmem:[%s485 + $0xc] sm:$0xf]
        %v944 = vld [vmem:[%s485 + $0x10] sm:$0xf]
        %v945 = vld [vmem:[%s485 + $0x14] sm:$0xf]
        %v946 = vld [vmem:[%s485 + $0x18] sm:$0xf]
        %v947 = vld [vmem:[%s485 + $0x1c] sm:$0xf]
        %v948 = vld [vmem:[%s485 + $0x20] sm:$0xf]
        %v949 = vld [vmem:[%s485 + $0x24] sm:$0xf]
        %v950 = vld [vmem:[%s485 + $0x28] sm:$0xf]
        %v951 = vld [vmem:[%s485 + $0x2c] sm:$0xf]
        %v952 = vld [vmem:[%s485 + $0x30] sm:$0xf]
        %v953 = vld [vmem:[%s485 + $0x34] sm:$0xf]
        %v954 = vld [vmem:[%s485 + $0x38] sm:$0xf]
        %v955 = vld [vmem:[%s485 + $0x3c] sm:$0xf]
        %v956 = vpack.c.bf16 %v909, %v908
        %v957 = vpack.c.bf16 %v911, %v910
        %v958 = vpack.c.bf16 %v913, %v912
        %v959 = vpack.c.bf16 %v915, %v914
        %v960 = vpack.c.bf16 %v917, %v916
        %v961 = vpack.c.bf16 %v919, %v918
        %v962 = vpack.c.bf16 %v921, %v920
        %v963 = vpack.c.bf16 %v923, %v922
        %v964 = vld [vmem:[%s488] sm:$0x1]
        %v966 = vlaneseq
        %v967 = vshrl.u32 %v966, 7
        %v968 = vsub.s32 0, %v967
        %v969 = vrot.slane %v964, %v968
        %v987 = vunpack.c.l.b16 %v940
        %v988 = vunpack.c.l.b16 %v941
        %v989 = vunpack.c.l.b16 %v942
        %v990 = vunpack.c.l.b16 %v943
        %v991 = vunpack.c.l.b16 %v944
        %v992 = vunpack.c.l.b16 %v945
        %v993 = vunpack.c.l.b16 %v946
        %v994 = vunpack.c.l.b16 %v947
        %v995 = vunpack.c.l.b16 %v948
        %v996 = vunpack.c.l.b16 %v949
        %v997 = vunpack.c.l.b16 %v950
        %v998 = vunpack.c.l.b16 %v951
        %v999 = vunpack.c.l.b16 %v952
        %v1000 = vunpack.c.l.b16 %v953
        %v1001 = vunpack.c.l.b16 %v954
        %v1002 = vunpack.c.l.b16 %v955
        %v1003 = vpack.c.b16 %v988, %v987
        %v1004 = vpack.c.b16 %v990, %v989
        %v1005 = vpack.c.b16 %v992, %v991
        %v1006 = vpack.c.b16 %v994, %v993
        %v1007 = vpack.c.b16 %v996, %v995
        %v1008 = vpack.c.b16 %v998, %v997
        %v1009 = vpack.c.b16 %v1000, %v999
        %v1010 = vpack.c.b16 %v1002, %v1001
        %1019 = vmatprep.subr.bf16.mxu0 0
        %1020 = vmatpush1.bf16.msra.mxu0 %v1003
        %1021 = vmatprep.subr.bf16.mxu0 0
        %1022 = vmatpush1.bf16.msra.mxu0 %v1004
        %1023 = vmatprep.subr.bf16.mxu0 0
        %1024 = vmatpush1.bf16.msra.mxu0 %v1005
        %1025 = vmatprep.subr.bf16.mxu0 0
        %1026 = vmatpush1.bf16.msra.mxu0 %v1006
        %1027 = vmatprep.subr.bf16.mxu0 0
        %1028 = vmatpush1.bf16.msra.mxu0 %v1007
        %1029 = vmatprep.subr.bf16.mxu0 0
        %1030 = vmatpush1.bf16.msra.mxu0 %v1008
        %1031 = vmatprep.subr.bf16.mxu0 0
        %1032 = vmatpush1.bf16.msra.mxu0 %v1009
        %1033 = vmatprep.subr.bf16.mxu0 0
        %1034 = vmatpush1.bf16.msra.mxu0 %v1010
        %1035 = vmatprep.subr.bf16.mxu0 0
        %1036 = vmatpush1.bf16.msra.mxu0 0
        %1037 = vmatprep.subr.bf16.mxu0 0
        %1038 = vmatpush1.bf16.msra.mxu0 0
        %1039 = vmatprep.subr.bf16.mxu0 0
        %1040 = vmatpush1.bf16.msra.mxu0 0
        %1041 = vmatprep.subr.bf16.mxu0 0
        %1042 = vmatpush1.bf16.msra.mxu0 0
        %1043 = vmatprep.subr.bf16.mxu0 0
        %1044 = vmatpush1.bf16.msra.mxu0 0
        %1045 = vmatprep.subr.bf16.mxu0 0
        %1046 = vmatpush1.bf16.msra.mxu0 0
        %1047 = vmatprep.subr.bf16.mxu0 0
        %1048 = vmatpush1.bf16.msra.mxu0 0
        %1049 = vmatprep.subr.bf16.mxu0 0
        %1050 = vmatpush1.bf16.msra.mxu0 0
        %1051 = vmatprep.mubr.bf16.mxu0 0
        %1052 = vmatmul.mubr.bf16.gmra.mrb[0].mxu0 %v956
        %v1053 = vpop.f32.mrb[0].mxu0
        %v1054 = vadd.f32 %v969, %v1053
        %v1055 = vpop.f32.mrb[0].mxu0
        %v1056 = vpop.f32.mrb[0].mxu0
        %v1057 = vadd.f32 %v969, %v1056
        %v1058 = vpop.f32.mrb[0].mxu0
        %1059 = vmatprep.mubr.bf16.mxu0 0
        %1060 = vmatmul.mubr.bf16.gmra.mrb[0].mxu0 %v957
        %v1061 = vpop.f32.mrb[0].mxu0
        %v1062 = vadd.f32 %v969, %v1061
        %v1063 = vpop.f32.mrb[0].mxu0
        %v1064 = vpop.f32.mrb[0].mxu0
        %v1065 = vadd.f32 %v969, %v1064
        %v1066 = vpop.f32.mrb[0].mxu0
        %1067 = vmatprep.mubr.bf16.mxu0 0
        %1068 = vmatmul.mubr.bf16.gmra.mrb[0].mxu0 %v958
        %v1069 = vpop.f32.mrb[0].mxu0
        %v1070 = vadd.f32 %v969, %v1069
        %v1071 = vpop.f32.mrb[0].mxu0
        %v1072 = vpop.f32.mrb[0].mxu0
        %v1073 = vadd.f32 %v969, %v1072
        %v1074 = vpop.f32.mrb[0].mxu0
        %1075 = vmatprep.mubr.bf16.mxu0 0
        %1076 = vmatmul.mubr.bf16.gmra.mrb[0].mxu0 %v959
        %v1077 = vpop.f32.mrb[0].mxu0
        %v1078 = vadd.f32 %v969, %v1077
        %v1079 = vpop.f32.mrb[0].mxu0
        %v1080 = vpop.f32.mrb[0].mxu0
        %v1081 = vadd.f32 %v969, %v1080
        %v1082 = vpop.f32.mrb[0].mxu0
        %1083 = vmatprep.mubr.bf16.mxu0 0
        %1084 = vmatmul.mubr.bf16.gmra.mrb[0].mxu0 %v960
        %v1085 = vpop.f32.mrb[0].mxu0
        %v1086 = vadd.f32 %v969, %v1085
        %v1087 = vpop.f32.mrb[0].mxu0
        %v1088 = vpop.f32.mrb[0].mxu0
        %v1089 = vadd.f32 %v969, %v1088
        %v1090 = vpop.f32.mrb[0].mxu0
        %1091 = vmatprep.mubr.bf16.mxu0 0
        %1092 = vmatmul.mubr.bf16.gmra.mrb[0].mxu0 %v961
        %v1093 = vpop.f32.mrb[0].mxu0
        %v1094 = vadd.f32 %v969, %v1093
        %v1095 = vpop.f32.mrb[0].mxu0
        %v1096 = vpop.f32.mrb[0].mxu0
        %v1097 = vadd.f32 %v969, %v1096
        %v1098 = vpop.f32.mrb[0].mxu0
        %1099 = vmatprep.mubr.bf16.mxu0 0
        %1100 = vmatmul.mubr.bf16.gmra.mrb[0].mxu0 %v962
        %v1101 = vpop.f32.mrb[0].mxu0
        %v1102 = vadd.f32 %v969, %v1101
        %v1103 = vpop.f32.mrb[0].mxu0
        %v1104 = vpop.f32.mrb[0].mxu0
        %v1105 = vadd.f32 %v969, %v1104
        %v1106 = vpop.f32.mrb[0].mxu0
        %1107 = vmatprep.mubr.bf16.mxu0 0
        %1108 = vmatmul.mubr.bf16.gmra.mrb[0].mxu0 %v963
        %v1109 = vpop.f32.mrb[0].mxu0
        %v1110 = vadd.f32 %v969, %v1109
        %v1111 = vpop.f32.mrb[0].mxu0
        %v1112 = vpop.f32.mrb[0].mxu0
        %v1113 = vadd.f32 %v969, %v1112
        %v1114 = vpop.f32.mrb[0].mxu0
        %1115 = vdwg.mxu0
        %v1116 = vmax.f32 %v1054, 0.0
        %v1117 = vmax.f32 %v1057, 0.0
        %v1118 = vmax.f32 %v1062, 0.0
        %v1119 = vmax.f32 %v1065, 0.0
        %v1120 = vmax.f32 %v1070, 0.0
        %v1121 = vmax.f32 %v1073, 0.0
        %v1122 = vmax.f32 %v1078, 0.0
        %v1123 = vmax.f32 %v1081, 0.0
        %v1124 = vmax.f32 %v1086, 0.0
        %v1125 = vmax.f32 %v1089, 0.0
        %v1126 = vmax.f32 %v1094, 0.0
        %v1127 = vmax.f32 %v1097, 0.0
        %v1128 = vmax.f32 %v1102, 0.0
        %v1129 = vmax.f32 %v1105, 0.0
        %v1130 = vmax.f32 %v1110, 0.0
        %v1131 = vmax.f32 %v1113, 0.0
        %v1132 = vpack.c.bf16 %v1117, %v1116
        %v1133 = vpack.c.bf16 %v1119, %v1118
        %v1134 = vpack.c.bf16 %v1121, %v1120
        %v1135 = vpack.c.bf16 %v1123, %v1122
        %v1136 = vpack.c.bf16 %v1125, %v1124
        %v1137 = vpack.c.bf16 %v1127, %v1126
        %v1138 = vpack.c.bf16 %v1129, %v1128
        %v1139 = vpack.c.bf16 %v1131, %v1130
        %v1140 = vld [vmem:[%s493] sm:$0xf]
        %v1141 = vld [vmem:[%s493 + $0x4] sm:$0xf]
        %v1142 = vld [vmem:[%s493 + $0x8] sm:$0xf]
        %v1143 = vld [vmem:[%s493 + $0xc] sm:$0xf]
        %v1144 = vld [vmem:[%s493 + $0x10] sm:$0xf]
        %v1145 = vld [vmem:[%s493 + $0x14] sm:$0xf]
        %v1146 = vld [vmem:[%s493 + $0x18] sm:$0xf]
        %v1147 = vld [vmem:[%s493 + $0x1c] sm:$0xf]
        %v1148 = vld [vmem:[%s493 + $0x20] sm:$0xf]
        %v1149 = vld [vmem:[%s493 + $0x24] sm:$0xf]
        %v1150 = vld [vmem:[%s493 + $0x28] sm:$0xf]
        %v1151 = vld [vmem:[%s493 + $0x2c] sm:$0xf]
        %v1152 = vld [vmem:[%s493 + $0x30] sm:$0xf]
        %v1153 = vld [vmem:[%s493 + $0x34] sm:$0xf]
        %v1154 = vld [vmem:[%s493 + $0x38] sm:$0xf]
        %v1155 = vld [vmem:[%s493 + $0x3c] sm:$0xf]
        %v1156 = vpack.c.bf16 %v925, %v924
        %v1157 = vpack.c.bf16 %v927, %v926
        %v1158 = vpack.c.bf16 %v929, %v928
        %v1159 = vpack.c.bf16 %v931, %v930
        %v1160 = vpack.c.bf16 %v933, %v932
        %v1161 = vpack.c.bf16 %v935, %v934
        %v1162 = vpack.c.bf16 %v937, %v936
        %v1163 = vpack.c.bf16 %v939, %v938
        %v1164 = vld [vmem:[%s496] sm:$0x1]
        %v1166 = vlaneseq
        %v1167 = vshrl.u32 %v1166, 7
        %v1168 = vsub.s32 0, %v1167
        %v1169 = vrot.slane %v1164, %v1168
        %v1187 = vunpack.c.l.b16 %v1140
        %v1188 = vunpack.c.l.b16 %v1141
        %v1189 = vunpack.c.l.b16 %v1142
        %v1190 = vunpack.c.l.b16 %v1143
        %v1191 = vunpack.c.l.b16 %v1144
        %v1192 = vunpack.c.l.b16 %v1145
        %v1193 = vunpack.c.l.b16 %v1146
        %v1194 = vunpack.c.l.b16 %v1147
        %v1195 = vunpack.c.l.b16 %v1148
        %v1196 = vunpack.c.l.b16 %v1149
        %v1197 = vunpack.c.l.b16 %v1150
        %v1198 = vunpack.c.l.b16 %v1151
        %v1199 = vunpack.c.l.b16 %v1152
        %v1200 = vunpack.c.l.b16 %v1153
        %v1201 = vunpack.c.l.b16 %v1154
        %v1202 = vunpack.c.l.b16 %v1155
        %v1203 = vpack.c.b16 %v1188, %v1187
        %v1204 = vpack.c.b16 %v1190, %v1189
        %v1205 = vpack.c.b16 %v1192, %v1191
        %v1206 = vpack.c.b16 %v1194, %v1193
        %v1207 = vpack.c.b16 %v1196, %v1195
        %v1208 = vpack.c.b16 %v1198, %v1197
        %v1209 = vpack.c.b16 %v1200, %v1199
        %v1210 = vpack.c.b16 %v1202, %v1201
        %1219 = vmatprep.subr.bf16.mxu0 0
        %1220 = vmatpush1.bf16.msra.mxu0 %v1203
        %1221 = vmatprep.subr.bf16.mxu0 0
        %1222 = vmatpush1.bf16.msra.mxu0 %v1204
        %1223 = vmatprep.subr.bf16.mxu0 0
        %1224 = vmatpush1.bf16.msra.mxu0 %v1205
        %1225 = vmatprep.subr.bf16.mxu0 0
        %1226 = vmatpush1.bf16.msra.mxu0 %v1206
        %1227 = vmatprep.subr.bf16.mxu0 0
        %1228 = vmatpush1.bf16.msra.mxu0 %v1207
        %1229 = vmatprep.subr.bf16.mxu0 0
        %1230 = vmatpush1.bf16.msra.mxu0 %v1208
        %1231 = vmatprep.subr.bf16.mxu0 0
        %1232 = vmatpush1.bf16.msra.mxu0 %v1209
        %1233 = vmatprep.subr.bf16.mxu0 0
        %1234 = vmatpush1.bf16.msra.mxu0 %v1210
        %1235 = vmatprep.subr.bf16.mxu0 0
        %1236 = vmatpush1.bf16.msra.mxu0 0
        %1237 = vmatprep.subr.bf16.mxu0 0
        %1238 = vmatpush1.bf16.msra.mxu0 0
        %1239 = vmatprep.subr.bf16.mxu0 0
        %1240 = vmatpush1.bf16.msra.mxu0 0
        %1241 = vmatprep.subr.bf16.mxu0 0
        %1242 = vmatpush1.bf16.msra.mxu0 0
        %1243 = vmatprep.subr.bf16.mxu0 0
        %1244 = vmatpush1.bf16.msra.mxu0 0
        %1245 = vmatprep.subr.bf16.mxu0 0
        %1246 = vmatpush1.bf16.msra.mxu0 0
        %1247 = vmatprep.subr.bf16.mxu0 0
        %1248 = vmatpush1.bf16.msra.mxu0 0
        %1249 = vmatprep.subr.bf16.mxu0 0
        %1250 = vmatpush1.bf16.msra.mxu0 0
        %1251 = vmatprep.mubr.bf16.mxu0 0
        %1252 = vmatmul.mubr.bf16.gmra.mrb[0].mxu0 %v1156
        %v1253 = vpop.f32.mrb[0].mxu0
        %v1254 = vadd.f32 %v1169, %v1253
        %v1255 = vpop.f32.mrb[0].mxu0
        %v1256 = vpop.f32.mrb[0].mxu0
        %v1257 = vadd.f32 %v1169, %v1256
        %v1258 = vpop.f32.mrb[0].mxu0
        %1259 = vmatprep.mubr.bf16.mxu0 0
        %1260 = vmatmul.mubr.bf16.gmra.mrb[0].mxu0 %v1157
        %v1261 = vpop.f32.mrb[0].mxu0
        %v1262 = vadd.f32 %v1169, %v1261
        %v1263 = vpop.f32.mrb[0].mxu0
        %v1264 = vpop.f32.mrb[0].mxu0
        %v1265 = vadd.f32 %v1169, %v1264
        %v1266 = vpop.f32.mrb[0].mxu0
        %1267 = vmatprep.mubr.bf16.mxu0 0
        %1268 = vmatmul.mubr.bf16.gmra.mrb[0].mxu0 %v1158
        %v1269 = vpop.f32.mrb[0].mxu0
        %v1270 = vadd.f32 %v1169, %v1269
        %v1271 = vpop.f32.mrb[0].mxu0
        %v1272 = vpop.f32.mrb[0].mxu0
        %v1273 = vadd.f32 %v1169, %v1272
        %v1274 = vpop.f32.mrb[0].mxu0
        %1275 = vmatprep.mubr.bf16.mxu0 0
        %1276 = vmatmul.mubr.bf16.gmra.mrb[0].mxu0 %v1159
        %v1277 = vpop.f32.mrb[0].mxu0
        %v1278 = vadd.f32 %v1169, %v1277
        %v1279 = vpop.f32.mrb[0].mxu0
        %v1280 = vpop.f32.mrb[0].mxu0
        %v1281 = vadd.f32 %v1169, %v1280
        %v1282 = vpop.f32.mrb[0].mxu0
        %1283 = vmatprep.mubr.bf16.mxu0 0
        %1284 = vmatmul.mubr.bf16.gmra.mrb[0].mxu0 %v1160
        %v1285 = vpop.f32.mrb[0].mxu0
        %v1286 = vadd.f32 %v1169, %v1285
        %v1287 = vpop.f32.mrb[0].mxu0
        %v1288 = vpop.f32.mrb[0].mxu0
        %v1289 = vadd.f32 %v1169, %v1288
        %v1290 = vpop.f32.mrb[0].mxu0
        %1291 = vmatprep.mubr.bf16.mxu0 0
        %1292 = vmatmul.mubr.bf16.gmra.mrb[0].mxu0 %v1161
        %v1293 = vpop.f32.mrb[0].mxu0
        %v1294 = vadd.f32 %v1169, %v1293
        %v1295 = vpop.f32.mrb[0].mxu0
        %v1296 = vpop.f32.mrb[0].mxu0
        %v1297 = vadd.f32 %v1169, %v1296
        %v1298 = vpop.f32.mrb[0].mxu0
        %1299 = vmatprep.mubr.bf16.mxu0 0
        %1300 = vmatmul.mubr.bf16.gmra.mrb[0].mxu0 %v1162
        %v1301 = vpop.f32.mrb[0].mxu0
        %v1302 = vadd.f32 %v1169, %v1301
        %v1303 = vpop.f32.mrb[0].mxu0
        %v1304 = vpop.f32.mrb[0].mxu0
        %v1305 = vadd.f32 %v1169, %v1304
        %v1306 = vpop.f32.mrb[0].mxu0
        %1307 = vmatprep.mubr.bf16.mxu0 0
        %1308 = vmatmul.mubr.bf16.gmra.mrb[0].mxu0 %v1163
        %v1309 = vpop.f32.mrb[0].mxu0
        %v1310 = vadd.f32 %v1169, %v1309
        %v1311 = vpop.f32.mrb[0].mxu0
        %v1312 = vpop.f32.mrb[0].mxu0
        %v1313 = vadd.f32 %v1169, %v1312
        %v1314 = vpop.f32.mrb[0].mxu0
        %1315 = vdwg.mxu0
        %v1316 = vmax.f32 %v1254, 0.0
        %v1317 = vmax.f32 %v1257, 0.0
        %v1318 = vmax.f32 %v1262, 0.0
        %v1319 = vmax.f32 %v1265, 0.0
        %v1320 = vmax.f32 %v1270, 0.0
        %v1321 = vmax.f32 %v1273, 0.0
        %v1322 = vmax.f32 %v1278, 0.0
        %v1323 = vmax.f32 %v1281, 0.0
        %v1324 = vmax.f32 %v1286, 0.0
        %v1325 = vmax.f32 %v1289, 0.0
        %v1326 = vmax.f32 %v1294, 0.0
        %v1327 = vmax.f32 %v1297, 0.0
        %v1328 = vmax.f32 %v1302, 0.0
        %v1329 = vmax.f32 %v1305, 0.0
        %v1330 = vmax.f32 %v1310, 0.0
        %v1331 = vmax.f32 %v1313, 0.0
        %v1332 = vpack.c.bf16 %v1317, %v1316
        %v1333 = vpack.c.bf16 %v1319, %v1318
        %v1334 = vpack.c.bf16 %v1321, %v1320
        %v1335 = vpack.c.bf16 %v1323, %v1322
        %v1336 = vpack.c.bf16 %v1325, %v1324
        %v1337 = vpack.c.bf16 %v1327, %v1326
        %v1338 = vpack.c.bf16 %v1329, %v1328
        %v1339 = vpack.c.bf16 %v1331, %v1330
        %v1340 = vld [vmem:[%s501] sm:$0xf]
        %v1341 = vld [vmem:[%s501 + $0x4] sm:$0xf]
        %v1342 = vld [vmem:[%s501 + $0x8] sm:$0xf]
        %v1343 = vld [vmem:[%s501 + $0xc] sm:$0xf]
        %v1344 = vld [vmem:[%s501 + $0x10] sm:$0xf]
        %v1345 = vld [vmem:[%s501 + $0x14] sm:$0xf]
        %v1346 = vld [vmem:[%s501 + $0x18] sm:$0xf]
        %v1347 = vld [vmem:[%s501 + $0x1c] sm:$0xf]
        %v1348 = vld [vmem:[%s501 + $0x20] sm:$0xf]
        %v1349 = vld [vmem:[%s501 + $0x24] sm:$0xf]
        %v1350 = vld [vmem:[%s501 + $0x28] sm:$0xf]
        %v1351 = vld [vmem:[%s501 + $0x2c] sm:$0xf]
        %v1352 = vld [vmem:[%s501 + $0x30] sm:$0xf]
        %v1353 = vld [vmem:[%s501 + $0x34] sm:$0xf]
        %v1354 = vld [vmem:[%s501 + $0x38] sm:$0xf]
        %v1355 = vld [vmem:[%s501 + $0x3c] sm:$0xf]
        %v1356 = vld [vmem:[%s501 + $0x40] sm:$0xf]
        %v1357 = vld [vmem:[%s501 + $0x44] sm:$0xf]
        %v1358 = vld [vmem:[%s501 + $0x48] sm:$0xf]
        %v1359 = vld [vmem:[%s501 + $0x4c] sm:$0xf]
        %v1360 = vld [vmem:[%s501 + $0x50] sm:$0xf]
        %v1361 = vld [vmem:[%s501 + $0x54] sm:$0xf]
        %v1362 = vld [vmem:[%s501 + $0x58] sm:$0xf]
        %v1363 = vld [vmem:[%s501 + $0x5c] sm:$0xf]
        %v1364 = vld [vmem:[%s501 + $0x60] sm:$0xf]
        %v1365 = vld [vmem:[%s501 + $0x64] sm:$0xf]
        %v1366 = vld [vmem:[%s501 + $0x68] sm:$0xf]
        %v1367 = vld [vmem:[%s501 + $0x6c] sm:$0xf]
        %v1368 = vld [vmem:[%s501 + $0x70] sm:$0xf]
        %v1369 = vld [vmem:[%s501 + $0x74] sm:$0xf]
        %v1370 = vld [vmem:[%s501 + $0x78] sm:$0xf]
        %v1371 = vld [vmem:[%s501 + $0x7c] sm:$0xf]
        %v1372 = vld [vmem:[%s504] sm:$0x1]
        %v1374 = vlaneseq
        %v1375 = vshrl.u32 %v1374, 7
        %v1376 = vsub.s32 0, %v1375
        %v1377 = vrot.slane %v1372, %v1376
        %v1411 = vunpack.c.l.b16 %v1340
        %v1412 = vunpack.c.l.b16 %v1341
        %v1413 = vunpack.c.l.b16 %v1342
        %v1414 = vunpack.c.l.b16 %v1343
        %v1415 = vunpack.c.l.b16 %v1344
        %v1416 = vunpack.c.l.b16 %v1345
        %v1417 = vunpack.c.l.b16 %v1346
        %v1418 = vunpack.c.l.b16 %v1347
        %v1419 = vunpack.c.l.b16 %v1348
        %v1420 = vunpack.c.l.b16 %v1349
        %v1421 = vunpack.c.l.b16 %v1350
        %v1422 = vunpack.c.l.b16 %v1351
        %v1423 = vunpack.c.l.b16 %v1352
        %v1424 = vunpack.c.l.b16 %v1353
        %v1425 = vunpack.c.l.b16 %v1354
        %v1426 = vunpack.c.l.b16 %v1355
        %v1427 = vunpack.c.l.b16 %v1356
        %v1428 = vunpack.c.l.b16 %v1357
        %v1429 = vunpack.c.l.b16 %v1358
        %v1430 = vunpack.c.l.b16 %v1359
        %v1431 = vunpack.c.l.b16 %v1360
        %v1432 = vunpack.c.l.b16 %v1361
        %v1433 = vunpack.c.l.b16 %v1362
        %v1434 = vunpack.c.l.b16 %v1363
        %v1435 = vunpack.c.l.b16 %v1364
        %v1436 = vunpack.c.l.b16 %v1365
        %v1437 = vunpack.c.l.b16 %v1366
        %v1438 = vunpack.c.l.b16 %v1367
        %v1439 = vunpack.c.l.b16 %v1368
        %v1440 = vunpack.c.l.b16 %v1369
        %v1441 = vunpack.c.l.b16 %v1370
        %v1442 = vunpack.c.l.b16 %v1371
        %v1443 = vpack.c.b16 %v1412, %v1411
        %v1444 = vpack.c.b16 %v1414, %v1413
        %v1445 = vpack.c.b16 %v1416, %v1415
        %v1446 = vpack.c.b16 %v1418, %v1417
        %v1447 = vpack.c.b16 %v1420, %v1419
        %v1448 = vpack.c.b16 %v1422, %v1421
        %v1449 = vpack.c.b16 %v1424, %v1423
        %v1450 = vpack.c.b16 %v1426, %v1425
        %v1451 = vpack.c.b16 %v1428, %v1427
        %v1452 = vpack.c.b16 %v1430, %v1429
        %v1453 = vpack.c.b16 %v1432, %v1431
        %v1454 = vpack.c.b16 %v1434, %v1433
        %v1455 = vpack.c.b16 %v1436, %v1435
        %v1456 = vpack.c.b16 %v1438, %v1437
        %v1457 = vpack.c.b16 %v1440, %v1439
        %v1458 = vpack.c.b16 %v1442, %v1441
        %1475 = vmatprep.subr.bf16.mxu0 0
        %1476 = vmatpush1.bf16.msra.mxu0 %v1443
        %1477 = vmatprep.subr.bf16.mxu0 0
        %1478 = vmatpush1.bf16.msra.mxu0 %v1444
        %1479 = vmatprep.subr.bf16.mxu0 0
        %1480 = vmatpush1.bf16.msra.mxu0 %v1445
        %1481 = vmatprep.subr.bf16.mxu0 0
        %1482 = vmatpush1.bf16.msra.mxu0 %v1446
        %1483 = vmatprep.subr.bf16.mxu0 0
        %1484 = vmatpush1.bf16.msra.mxu0 %v1447
        %1485 = vmatprep.subr.bf16.mxu0 0
        %1486 = vmatpush1.bf16.msra.mxu0 %v1448
        %1487 = vmatprep.subr.bf16.mxu0 0
        %1488 = vmatpush1.bf16.msra.mxu0 %v1449
        %1489 = vmatprep.subr.bf16.mxu0 0
        %1490 = vmatpush1.bf16.msra.mxu0 %v1450
        %1491 = vmatprep.subr.bf16.mxu0 0
        %1492 = vmatpush1.bf16.msra.mxu0 %v1451
        %1493 = vmatprep.subr.bf16.mxu0 0
        %1494 = vmatpush1.bf16.msra.mxu0 %v1452
        %1495 = vmatprep.subr.bf16.mxu0 0
        %1496 = vmatpush1.bf16.msra.mxu0 %v1453
        %1497 = vmatprep.subr.bf16.mxu0 0
        %1498 = vmatpush1.bf16.msra.mxu0 %v1454
        %1499 = vmatprep.subr.bf16.mxu0 0
        %1500 = vmatpush1.bf16.msra.mxu0 %v1455
        %1501 = vmatprep.subr.bf16.mxu0 0
        %1502 = vmatpush1.bf16.msra.mxu0 %v1456
        %1503 = vmatprep.subr.bf16.mxu0 0
        %1504 = vmatpush1.bf16.msra.mxu0 %v1457
        %1505 = vmatprep.subr.bf16.mxu0 0
        %1506 = vmatpush1.bf16.msra.mxu0 %v1458
        %1507 = vmatprep.mubr.bf16.mxu0 %v1332
        %1508 = vmatmul.mubr.bf16.gmra.mrb[0].mxu0 %v1132
        %v1509 = vpop.f32.mrb[0].mxu0
        %v1510 = vadd.f32 %v1377, %v1509
        %v1511 = vpop.f32.mrb[0].mxu0
        %v1512 = vpop.f32.mrb[0].mxu0
        %v1513 = vadd.f32 %v1377, %v1512
        %v1514 = vpop.f32.mrb[0].mxu0
        %1515 = vmatprep.mubr.bf16.mxu0 %v1333
        %1516 = vmatmul.mubr.bf16.gmra.mrb[0].mxu0 %v1133
        %v1517 = vpop.f32.mrb[0].mxu0
        %v1518 = vadd.f32 %v1377, %v1517
        %v1519 = vpop.f32.mrb[0].mxu0
        %v1520 = vpop.f32.mrb[0].mxu0
        %v1521 = vadd.f32 %v1377, %v1520
        %v1522 = vpop.f32.mrb[0].mxu0
        %1523 = vmatprep.mubr.bf16.mxu0 %v1334
        %1524 = vmatmul.mubr.bf16.gmra.mrb[0].mxu0 %v1134
        %v1525 = vpop.f32.mrb[0].mxu0
        %v1526 = vadd.f32 %v1377, %v1525
        %v1527 = vpop.f32.mrb[0].mxu0
        %v1528 = vpop.f32.mrb[0].mxu0
        %v1529 = vadd.f32 %v1377, %v1528
        %v1530 = vpop.f32.mrb[0].mxu0
        %1531 = vmatprep.mubr.bf16.mxu0 %v1335
        %1532 = vmatmul.mubr.bf16.gmra.mrb[0].mxu0 %v1135
        %v1533 = vpop.f32.mrb[0].mxu0
        %v1534 = vadd.f32 %v1377, %v1533
        %v1535 = vpop.f32.mrb[0].mxu0
        %v1536 = vpop.f32.mrb[0].mxu0
        %v1537 = vadd.f32 %v1377, %v1536
        %v1538 = vpop.f32.mrb[0].mxu0
        %1539 = vmatprep.mubr.bf16.mxu0 %v1336
        %1540 = vmatmul.mubr.bf16.gmra.mrb[0].mxu0 %v1136
        %v1541 = vpop.f32.mrb[0].mxu0
        %v1542 = vadd.f32 %v1377, %v1541
        %v1543 = vpop.f32.mrb[0].mxu0
        %v1544 = vpop.f32.mrb[0].mxu0
        %v1545 = vadd.f32 %v1377, %v1544
        %v1546 = vpop.f32.mrb[0].mxu0
        %1547 = vmatprep.mubr.bf16.mxu0 %v1337
        %1548 = vmatmul.mubr.bf16.gmra.mrb[0].mxu0 %v1137
        %v1549 = vpop.f32.mrb[0].mxu0
        %v1550 = vadd.f32 %v1377, %v1549
        %v1551 = vpop.f32.mrb[0].mxu0
        %v1552 = vpop.f32.mrb[0].mxu0
        %v1553 = vadd.f32 %v1377, %v1552
        %v1554 = vpop.f32.mrb[0].mxu0
        %1555 = vmatprep.mubr.bf16.mxu0 %v1338
        %1556 = vmatmul.mubr.bf16.gmra.mrb[0].mxu0 %v1138
        %v1557 = vpop.f32.mrb[0].mxu0
        %v1558 = vadd.f32 %v1377, %v1557
        %v1559 = vpop.f32.mrb[0].mxu0
        %v1560 = vpop.f32.mrb[0].mxu0
        %v1561 = vadd.f32 %v1377, %v1560
        %v1562 = vpop.f32.mrb[0].mxu0
        %1563 = vmatprep.mubr.bf16.mxu0 %v1339
        %1564 = vmatmul.mubr.bf16.gmra.mrb[0].mxu0 %v1139
        %v1565 = vpop.f32.mrb[0].mxu0
        %v1566 = vadd.f32 %v1377, %v1565
        %v1567 = vpop.f32.mrb[0].mxu0
        %v1568 = vpop.f32.mrb[0].mxu0
        %v1569 = vadd.f32 %v1377, %v1568
        %v1570 = vpop.f32.mrb[0].mxu0
        %1571 = vdwg.mxu0
        %v1572 = vmul.f32 %v1510, 0.5
        %v1573 = vmul.f32 %v1513, 0.5
        %v1574 = vmul.f32 %v1518, 0.5
        %v1575 = vmul.f32 %v1521, 0.5
        %v1576 = vmul.f32 %v1526, 0.5
        %v1577 = vmul.f32 %v1529, 0.5
        %v1578 = vmul.f32 %v1534, 0.5
        %v1579 = vmul.f32 %v1537, 0.5
        %v1580 = vmul.f32 %v1542, 0.5
        %v1581 = vmul.f32 %v1545, 0.5
        %v1582 = vmul.f32 %v1550, 0.5
        %v1583 = vmul.f32 %v1553, 0.5
        %v1584 = vmul.f32 %v1558, 0.5
        %v1585 = vmul.f32 %v1561, 0.5
        %v1586 = vmul.f32 %v1566, 0.5
        %v1587 = vmul.f32 %v1569, 0.5
        %v1588 = vadd.f32 %v888, %v1572
        %v1589 = vadd.f32 %v889, %v1573
        %v1590 = vadd.f32 %v890, %v1574
        %v1591 = vadd.f32 %v891, %v1575
        %v1592 = vadd.f32 %v892, %v1576
        %v1593 = vadd.f32 %v893, %v1577
        %v1594 = vadd.f32 %v894, %v1578
        %v1595 = vadd.f32 %v895, %v1579
        %v1596 = vadd.f32 %v896, %v1580
        %v1597 = vadd.f32 %v897, %v1581
        %v1598 = vadd.f32 %v898, %v1582
        %v1599 = vadd.f32 %v899, %v1583
        %v1600 = vadd.f32 %v900, %v1584
        %v1601 = vadd.f32 %v901, %v1585
        %v1602 = vadd.f32 %v902, %v1586
        %v1603 = vadd.f32 %v903, %v1587
        %1604 = vst [vmem:[#allocation2] sm:$0xff] %v1588
        %1605 = vst [vmem:[#allocation2 + $0x8] sm:$0xff] %v1589
        %1606 = vst [vmem:[#allocation2 + $0x10] sm:$0xff] %v1590
        %1607 = vst [vmem:[#allocation2 + $0x18] sm:$0xff] %v1591
        %1608 = vst [vmem:[#allocation2 + $0x20] sm:$0xff] %v1592
        %1609 = vst [vmem:[#allocation2 + $0x28] sm:$0xff] %v1593
        %1610 = vst [vmem:[#allocation2 + $0x30] sm:$0xff] %v1594
        %1611 = vst [vmem:[#allocation2 + $0x38] sm:$0xff] %v1595
        %1612 = vst [vmem:[#allocation2 + $0x40] sm:$0xff] %v1596
        %1613 = vst [vmem:[#allocation2 + $0x48] sm:$0xff] %v1597
        %1614 = vst [vmem:[#allocation2 + $0x50] sm:$0xff] %v1598
        %1615 = vst [vmem:[#allocation2 + $0x58] sm:$0xff] %v1599
        %1616 = vst [vmem:[#allocation2 + $0x60] sm:$0xff] %v1600
        %1617 = vst [vmem:[#allocation2 + $0x68] sm:$0xff] %v1601
        %1618 = vst [vmem:[#allocation2 + $0x70] sm:$0xff] %v1602
        %1619 = vst [vmem:[#allocation2 + $0x78] sm:$0xff] %v1603
        // Predicated region
        $region69: #{resnet_forward.1} parent=63 // pred_check
          %p1620 = pneg %p506
        $region70: #{resnet_forward.1} parent=63 // pred_check_branch
          %1622 = sbr.rel (%p1620) target = $region72
        $region71: #{resnet_forward.1} parent=63 // pred_region
          %v1623 = vmul.f32 %v1588, 0.5
          %v1624 = vmul.f32 %v1589, 0.5
          %v1625 = vmul.f32 %v1590, 0.5
          %v1626 = vmul.f32 %v1591, 0.5
          %v1627 = vmul.f32 %v1592, 0.5
          %v1628 = vmul.f32 %v1593, 0.5
          %v1629 = vmul.f32 %v1594, 0.5
          %v1630 = vmul.f32 %v1595, 0.5
          %v1631 = vmul.f32 %v1596, 0.5
          %v1632 = vmul.f32 %v1597, 0.5
          %v1633 = vmul.f32 %v1598, 0.5
          %v1634 = vmul.f32 %v1599, 0.5
          %v1635 = vmul.f32 %v1600, 0.5
          %v1636 = vmul.f32 %v1601, 0.5
          %v1637 = vmul.f32 %v1602, 0.5
          %v1638 = vmul.f32 %v1603, 0.5
          %1639 = vst [vmem:[#allocation3] sm:$0xff] %v1623
          %1640 = vst [vmem:[#allocation3 + $0x8] sm:$0xff] %v1624
          %1641 = vst [vmem:[#allocation3 + $0x10] sm:$0xff] %v1625
          %1642 = vst [vmem:[#allocation3 + $0x18] sm:$0xff] %v1626
          %1643 = vst [vmem:[#allocation3 + $0x20] sm:$0xff] %v1627
          %1644 = vst [vmem:[#allocation3 + $0x28] sm:$0xff] %v1628
          %1645 = vst [vmem:[#allocation3 + $0x30] sm:$0xff] %v1629
          %1646 = vst [vmem:[#allocation3 + $0x38] sm:$0xff] %v1630
          %1647 = vst [vmem:[#allocation3 + $0x40] sm:$0xff] %v1631
          %1648 = vst [vmem:[#allocation3 + $0x48] sm:$0xff] %v1632
          %1649 = vst [vmem:[#allocation3 + $0x50] sm:$0xff] %v1633
          %1650 = vst [vmem:[#allocation3 + $0x58] sm:$0xff] %v1634
          %1651 = vst [vmem:[#allocation3 + $0x60] sm:$0xff] %v1635
          %1652 = vst [vmem:[#allocation3 + $0x68] sm:$0xff] %v1636
          %1653 = vst [vmem:[#allocation3 + $0x70] sm:$0xff] %v1637
          %1654 = vst [vmem:[#allocation3 + $0x78] sm:$0xff] %v1638
        $region72: #{resnet_forward.1} parent=63 // pred_fallthru
          _
        %p1655 = scmp.eq.s32.totalorder %s32, 3
        // Predicated region
        $region73: #{resnet_forward.1} parent=63 // pred_check
          %p1656 = pneg %p1655
        $region74: #{resnet_forward.1} parent=63 // pred_check_branch
          %1658 = sbr.rel (%p1656) target = $region76
        $region75: #{resnet_forward.1} parent=63 // pred_region
          %s1659 = sadd.f32 %s887, 1.0
          %v1660 = vstv %s1659
          %v1661 = vrcp.pop %v1660
          %s1662 = vtos %v1661
          %v1663 = vstv %s1662
          %v1664 = vmul.f32 %v1588, %v1663
          %v1665 = vmul.f32 %v1589, %v1663
          %v1666 = vmul.f32 %v1590, %v1663
          %v1667 = vmul.f32 %v1591, %v1663
          %v1668 = vmul.f32 %v1592, %v1663
          %v1669 = vmul.f32 %v1593, %v1663
          %v1670 = vmul.f32 %v1594, %v1663
          %v1671 = vmul.f32 %v1595, %v1663
          %v1672 = vmul.f32 %v1596, %v1663
          %v1673 = vmul.f32 %v1597, %v1663
          %v1674 = vmul.f32 %v1598, %v1663
          %v1675 = vmul.f32 %v1599, %v1663
          %v1676 = vmul.f32 %v1600, %v1663
          %v1677 = vmul.f32 %v1601, %v1663
          %v1678 = vmul.f32 %v1602, %v1663
          %v1679 = vmul.f32 %v1603, %v1663
          %v1680 = vpack.c.bf16 %v1665, %v1664
          %v1681 = vpack.c.bf16 %v1667, %v1666
          %v1682 = vpack.c.bf16 %v1669, %v1668
          %v1683 = vpack.c.bf16 %v1671, %v1670
          %v1684 = vpack.c.bf16 %v1673, %v1672
          %v1685 = vpack.c.bf16 %v1675, %v1674
          %v1686 = vpack.c.bf16 %v1677, %v1676
          %v1687 = vpack.c.bf16 %v1679, %v1678
          %v1688 = vld [vmem:[%s9] sm:$0x1]
          %v1689 = vld [vmem:[#allocation4] sm:$0x1]
          %1691 = vset.pattern.permute.xlu0 0
          %1692 = vperm.xlu0 %1691, %v1689
          %v1693 = vpop.permute.xlu0 %1692
          %v1695 = vlaneseq
          %v1696 = vshrl.u32 %v1695, 7
          %v1697 = vsub.s32 0, %v1696
          %v1698 = vrot.slane %v1693, %v1697
          %1699 = vmatprep.subr.bf16.mxu0 0
          %1700 = vmatpush1.bf16.xpose.msra.mxu0 %v1680
          %1701 = vmatprep.subr.bf16.mxu0 0
          %1702 = vmatpush1.bf16.xpose.msra.mxu0 %v1681
          %1703 = vmatprep.subr.bf16.mxu0 0
          %1704 = vmatpush1.bf16.xpose.msra.mxu0 %v1682
          %1705 = vmatprep.subr.bf16.mxu0 0
          %1706 = vmatpush1.bf16.xpose.msra.mxu0 %v1683
          %1707 = vmatprep.subr.bf16.mxu0 0
          %1708 = vmatpush1.bf16.xpose.msra.mxu0 %v1684
          %1709 = vmatprep.subr.bf16.mxu0 0
          %1710 = vmatpush1.bf16.xpose.msra.mxu0 %v1685
          %1711 = vmatprep.subr.bf16.mxu0 0
          %1712 = vmatpush1.bf16.xpose.msra.mxu0 %v1686
          %1713 = vmatprep.subr.bf16.mxu0 0
          %1714 = vmatpush1.bf16.xpose.msra.mxu0 %v1687
          %1715 = vmatprep.subr.bf16.mxu0 0
          %1716 = vmatpush1.bf16.xpose.msra.mxu0 0
          %1717 = vmatprep.subr.bf16.mxu0 0
          %1718 = vmatpush1.bf16.xpose.msra.mxu0 0
          %1719 = vmatprep.subr.bf16.mxu0 0
          %1720 = vmatpush1.bf16.xpose.msra.mxu0 0
          %1721 = vmatprep.subr.bf16.mxu0 0
          %1722 = vmatpush1.bf16.xpose.msra.mxu0 0
          %1723 = vmatprep.subr.bf16.mxu0 0
          %1724 = vmatpush1.bf16.xpose.msra.mxu0 0
          %1725 = vmatprep.subr.bf16.mxu0 0
          %1726 = vmatpush1.bf16.xpose.msra.mxu0 0
          %1727 = vmatprep.subr.bf16.mxu0 0
          %1728 = vmatpush1.bf16.xpose.msra.mxu0 0
          %1729 = vmatprep.subr.bf16.mxu0 0
          %1730 = vmatpush1.bf16.xpose.msra.mxu0 0
          %1731 = vmatprep.mubr.bf16.mxu0 0
          %1732 = vmatmul.mubr.bf16.gmra.mrb[0].mxu0 %v1688
          %v1733 = vpop.f32.mrb[0].mxu0
          %v1734 = vadd.f32 %v1698, %v1733
          %v1735 = vpop.f32.mrb[0].mxu0
          %v1736 = vpop.f32.mrb[0].mxu0
          %v1737 = vpop.f32.mrb[0].mxu0
          %1738 = vdwg.mxu0
          %1739 = vst [vmem:[%s473] sm:$0x1] %v1734
        $region76: #{resnet_forward.1} parent=63 // pred_fallthru
          _
        %s1740 = sand.u32 %s313, 1
        %s1741 = scalar_lea.sflag [#allocation6], %s1740
        %s1742 = sand.u32 %s313, 1
        %s1743 = scalar_lea.vmem [#allocation5], %s1742
        // Predicated region
        $region77: #{resnet_forward.1} parent=63 // pred_check
          %p1744 = pneg %p323
        $region78: #{resnet_forward.1} parent=63 // pred_check_branch
          %1746 = sbr.rel (%p1744) target = $region80
        $region79: #{resnet_forward.1} parent=63 // pred_region
          %s1748 = ssub.s32 16, 16
          %1749 = vsyncadd %s1741, %s1748
          %s1750 = smul.addr %s31, 16
          %s1751 = scalar_lea.hbm %s11, %s1750
          %s1753 = sshll.u32 %s1743, 4
          %s1754 = int_to_ptr.vmem [resolvable:$true] %s1753
          %1756 = dma.vmem_to_hbm [thread:$0]  %s1754, 16, %s1751, %s1741
        $region80: #{resnet_forward.1} parent=63 // pred_fallthru
          _
      $region64: #{resnet_forward.1} parent=5 // pred_fallthru
        _
      %p1757 = scmp.le.s32.totalorder 2, %s22
      // Predicated region
      $region81: #{resnet_forward.1} parent=5 // pred_check
        %p1758 = pneg %p1757
      $region82: #{resnet_forward.1} parent=5 // pred_check_branch
        %1760 = sbr.rel (%p1758) target = $region84
      $region83: #{resnet_forward.1} parent=5 // pred_region
        %s1761 = ssub.s32 %s22, 2
        // Predicated region
        $region85: #{resnet_forward.1} parent=83 // pred_check
          %p1762 = pneg %p329
        $region86: #{resnet_forward.1} parent=83 // pred_check_branch
          %1764 = sbr.rel (%p1762) target = $region88
        $region87: #{resnet_forward.1} parent=83 // pred_region
          %s1765 = sand.u32 %s314, 1
          %s1766 = scalar_lea.sflag [#allocation6], %s1765
          %s1767 = sand.u32 %s314, 1
          %s1768 = scalar_lea.vmem [#allocation5], %s1767
          %1769 = dma.done %s1766, 16
        $region88: #{resnet_forward.1} parent=83 // pred_fallthru
          _
      $region84: #{resnet_forward.1} parent=5 // pred_fallthru
        _
    $region6: #{resnet_forward.1} parent=1 // loop_footer
      %s26 = sadd.s32 1, %s22
    $region7: #{resnet_forward.1} parent=1 // loop_footer_branch
      %21 = sbr.rel target = $region3
    $region8: #{resnet_forward.1} parent=1 // loop_exit
      _
    %1770 = vsyncpa [#allocation6], 1
    %s1771 = scalar_lea.sflag [#allocation6], 1
    %1772 = vsyncpa %s1771, 1

</llo_original>
